<compile_context>
chip_gen: v5e
topology: v5e:2x2
jax: 0.10.0
libtpu: 0.0.40
codegen_flags: <defaults>
</compile_context>

<pallas_src>
import functools

import jax
import jax.numpy as jnp
from jax.experimental import pallas as pl
from jax.experimental.pallas import tpu as pltpu

_TAPS = tuple((dh, dw) for dh in range(3) for dw in range(3))   # k = 3*dh + dw


# ----------------------------------------------------------------------------
# Fused Pallas kernel: Bt images packed on the lane axis per grid step
# ----------------------------------------------------------------------------
def admm_resnet_kernel(x_ref, A_ref, At_ref, G_ref, wenc_ref, benc_ref,
                       mask_ref, w1_ref, b1_ref, w2a_ref, b2a_ref,
                       w2b_ref, b2b_ref, wout_ref, bout_ref,
                       alpha_ref, theta_ref, o_ref, *, n_iters, W):
    x = x_ref[0]                                   # (C, Np)  pixels on lanes
    Np = x.shape[1]
    A = A_ref[...]                                 # (M, C)
    At = At_ref[...]                               # (C, M)
    G = G_ref[...]                                 # (C, C) = A^T A

    # ---------------- encoder: unrolled, algebraically-folded ADMM ----------
    y = jnp.dot(A, x, preferred_element_type=jnp.float32)      # (M, Np)
    xk0 = jnp.dot(At, y, preferred_element_type=jnp.float32)   # (C, Np) = A^T y
    xk = xk0
    u = jnp.zeros_like(xk)
    for k in range(n_iters):
        theta = theta_ref[k]
        alpha = alpha_ref[k]
        v = xk + u
        z = v - jnp.clip(v, -theta, theta)          # soft-threshold (clamp form)
        # A^T (A xk - y) == G xk - xk0  -> one (C,C) matmul per iteration
        xk = z - alpha * (jnp.dot(G, xk, preferred_element_type=jnp.float32) - xk0)
        u = u + xk - z

    # fused 1x1 projection + ReLU
    f = jnp.maximum(
        jnp.dot(wenc_ref[...], xk, preferred_element_type=jnp.float32)
        + benc_ref[...], 0.0)                       # (c_enc, Np)

    # ---------------- decoder: small ResNet ---------------------------------
    def conv3x3(inp, w_ref, b_ref):
        """One fused matmul per 3x3 conv: (Cout, 9*Cin) @ (9*Cin, Np)."""
        taps = []
        for k, (dh, dw) in enumerate(_TAPS):
            off = (dh - 1) * W + (dw - 1)           # source-pixel offset
            if off == 0:
                taps.append(inp)                    # center tap: always valid
            else:
                # taps[k][:, p] = inp[:, p + off] if source pixel valid else 0
                xs = pltpu.roll(inp, (-off) % Np, 1)
                taps.append(xs * mask_ref[k])       # (1, Np) hoisted mask
        stacked = jnp.concatenate(taps, axis=0)     # (9*Cin, Np)
        return jnp.dot(w_ref[...], stacked,
                       preferred_element_type=jnp.float32) + b_ref[...]

    h = jnp.maximum(conv3x3(f, w1_ref, b1_ref), 0.0)
    r = jnp.maximum(conv3x3(h, w2a_ref, b2a_ref), 0.0)
    r = conv3x3(r, w2b_ref, b2b_ref)
    h = jnp.maximum(h + r, 0.0)                     # fused residual add + ReLU
    out = conv3x3(h, wout_ref, bout_ref)

    o_ref[0] = out.astype(o_ref.dtype)


# ----------------------------------------------------------------------------
# Wrapper (layout plumbing only; every FLOP runs inside the kernel)
# ----------------------------------------------------------------------------
def _pick_images_per_step(batch, hw, max_lanes=2048):
    """Largest divisor of `batch` that keeps >=2 grid steps (v7x: 2 TCs) and a
    bounded lane width.  batch=2 -> 1 (grid 2); batch=8 -> 4 (grid 2)."""
    best = 1
    for bt in range(1, batch + 1):
        if batch % bt:
            continue
        if bt * hw > max_lanes:
            continue
        if batch >= 2 and batch // bt < 2:
            continue
        best = bt
    return best


def admm_resnet_forward(x_nchw, params, images_per_step=None):
    B, C, H, W = x_nchw.shape
    HW = H * W
    Bt = images_per_step if images_per_step is not None else _pick_images_per_step(B, HW)
    assert B % Bt == 0
    Gsteps = B // Bt
    Np = Bt * HW

    # Pack Bt images onto the lane axis per grid step.
    x = x_nchw.reshape(Gsteps, Bt, C, HW).transpose(0, 2, 1, 3).reshape(Gsteps, C, Np)

    hp = jax.lax.Precision.HIGHEST
    A = params["A"]                                 # (M, C)
    At = A.T                                        # derived here -> cannot desync
    Gram = jnp.dot(At, A, precision=hp)             # (C, C) ADMM fold
    wencT = params["w_enc"].T                       # (c_enc, C)
    benc = params["b_enc"][:, None]                 # (c_enc, 1)

    def fuse_w(w):     # (3,3,Cin,Cout) -> (Cout, 9*Cin), tap order k = 3*dh + dw
        return jnp.transpose(w, (3, 0, 1, 2)).reshape(w.shape[3], 9 * w.shape[2])

    w1f, w2af, w2bf, woutf = (fuse_w(params[k]) for k in ("w1", "w2a", "w2b", "w_out"))
    b1, b2a, b2b, bout = (params[k][:, None] for k in ("b1", "b2a", "b2b", "b_out"))

    # Hoisted per-tap border-validity masks, per-image pixel coords (p % HW) so
    # the in-kernel lane rolls never leak pixels across packed images.
    q = jnp.arange(HW)
    hh, ww = q // W, q % W
    mlist = []
    for dh, dw in _TAPS:
        sh, sw = hh + dh - 1, ww + dw - 1
        m = ((sh >= 0) & (sh < H) & (sw >= 0) & (sw < W)).astype(jnp.float32)
        mlist.append(jnp.tile(m, Bt))
    mask = jnp.stack(mlist)[:, None, :]             # (9, 1, Np)

    M = A.shape[0]
    c_enc = wencT.shape[0]
    feat = w1f.shape[0]
    n_iters = params["alpha"].shape[0]

    kern = functools.partial(admm_resnet_kernel, n_iters=n_iters, W=W)

    def rep(*shape):                                # whole-array, grid-invariant block
        n = len(shape)
        return pl.BlockSpec(shape, lambda g: (0,) * n)

    out = pl.pallas_call(
        kern,
        out_shape=jax.ShapeDtypeStruct((Gsteps, C, Np), jnp.float32),
        grid=(Gsteps,),
        in_specs=[
            pl.BlockSpec((1, C, Np), lambda g: (g, 0, 0)),     # x: Bt images/step
            rep(M, C), rep(C, M), rep(C, C),                   # A, A^T, A^T A
            rep(c_enc, C), rep(c_enc, 1),                      # w_enc^T, b_enc
            rep(9, 1, Np),                                     # border masks
            rep(feat, 9 * c_enc), rep(feat, 1),                # conv1 (fused taps)
            rep(feat, 9 * feat), rep(feat, 1),                 # conv2a
            rep(feat, 9 * feat), rep(feat, 1),                 # conv2b
            rep(C, 9 * feat), rep(C, 1),                       # conv_out
            pl.BlockSpec(memory_space=pltpu.SMEM),             # alpha (n_iters,)
            pl.BlockSpec(memory_space=pltpu.SMEM),             # theta (n_iters,)
        ],
        out_specs=pl.BlockSpec((1, C, Np), lambda g: (g, 0, 0)),
        compiler_params=pltpu.CompilerParams(
            dimension_semantics=("parallel",)),
    )(x, A, At, Gram, wencT, benc, mask, w1f, b1, w2af, b2a, w2bf, b2b,
      woutf, bout, params["alpha"], params["theta"])

    # Unpack lanes back to NCHW.
    return out.reshape(Gsteps, C, Bt, HW).transpose(0, 2, 1, 3).reshape(B, C, H, W)


# ----------------------------------------------------------------------------
# Parameters + pure-JAX reference (same math, un-folded ADMM, XLA convs)
# ----------------------------------------------------------------------------
def init_params(key, c_in, c_enc, feat, m_meas, n_iters):
    ks = jax.random.split(key, 8)
    return {
        "A": jax.random.normal(ks[0], (m_meas, c_in), jnp.float32) * 0.3,
        "alpha": jnp.full((n_iters,), 0.5, jnp.float32),
        "theta": jnp.full((n_iters,), 0.01, jnp.float32),
        "w_enc": jax.random.normal(ks[1], (c_in, c_enc), jnp.float32) * 0.2,
        "b_enc": jnp.zeros((c_enc,), jnp.float32),
        "w1": jax.random.normal(ks[2], (3, 3, c_enc, feat), jnp.float32) * 0.1,
        "b1": jnp.zeros((feat,), jnp.float32),
        "w2a": jax.random.normal(ks[3], (3, 3, feat, feat), jnp.float32) * 0.1,
        "b2a": jnp.zeros((feat,), jnp.float32),
        "w2b": jax.random.normal(ks[4], (3, 3, feat, feat), jnp.float32) * 0.1,
        "b2b": jnp.zeros((feat,), jnp.float32),
        "w_out": jax.random.normal(ks[5], (3, 3, feat, c_in), jnp.float32) * 0.1,
        "b_out": jnp.zeros((c_in,), jnp.float32),
    }


def _reference_forward(x, params):
    B, C, H, W = x.shape
    hp = jax.lax.Precision.HIGHEST
    xf = x.reshape(B, C, H * W)
    A = params["A"]
    At = A.T
    y = jnp.einsum("mc,bcp->bmp", A, xf, precision=hp)
    xk = jnp.einsum("cm,bmp->bcp", At, y, precision=hp)
    u = jnp.zeros_like(xk)
    for k in range(params["alpha"].shape[0]):
        theta = params["theta"][k]
        alpha = params["alpha"][k]
        v = xk + u
        z = jnp.sign(v) * jnp.maximum(jnp.abs(v) - theta, 0.0)
        r = jnp.einsum("mc,bcp->bmp", A, xk, precision=hp) - y
        xk = z - alpha * jnp.einsum("cm,bmp->bcp", At, r, precision=hp)
        u = u + xk - z
    f = jnp.maximum(
        jnp.einsum("ce,bcp->bep", params["w_enc"], xk, precision=hp)
        + params["b_enc"][None, :, None], 0.0)
    f = f.reshape(B, -1, H, W)

    def conv(xin, w, b):
        out = jax.lax.conv_general_dilated(
            xin, w, (1, 1), "SAME",
            dimension_numbers=("NCHW", "HWIO", "NCHW"), precision=hp)
        return out + b[None, :, None, None]

    h = jnp.maximum(conv(f, params["w1"], params["b1"]), 0.0)
    r = jnp.maximum(conv(h, params["w2a"], params["b2a"]), 0.0)
    r = conv(r, params["w2b"], params["b2b"])
    h = jnp.maximum(h + r, 0.0)
    return conv(h, params["w_out"], params["b_out"])


# TODO(synk): torch.load of pretrained ADMM/ResNet state_dicts has no in-script
# equivalent; parameters are synthesized deterministically instead.

if __name__ == "__main__":
    B, C, H, W = 2, 4, 16, 16
    C_ENC, FEAT, M_MEAS, N_ITERS = 8, 16, 8, 3

    key = jax.random.PRNGKey(0)
    kx, kp, kx2 = jax.random.split(key, 3)
    x = jax.random.normal(kx, (B, C, H, W), jnp.float32)
    params = init_params(kp, C, C_ENC, FEAT, M_MEAS, N_ITERS)

    fwd = jax.jit(admm_resnet_forward)
    y = fwd(x, params)
    jax.block_until_ready(y)
    assert y.shape == (B, C, H, W), y.shape
    assert bool(jnp.all(jnp.isfinite(y)))

    y_ref = _reference_forward(x, params)
    rel = float(jnp.linalg.norm(y - y_ref) / (jnp.linalg.norm(y_ref) + 1e-12))
    assert rel < 5e-2, rel

    # Also exercise the batch-packed path (Bt > 1 images per grid step).
    x2 = jax.random.normal(kx2, (8, C, H, W), jnp.float32)
    y2 = fwd(x2, params)
    jax.block_until_ready(y2)
    y2_ref = _reference_forward(x2, params)
    rel2 = float(jnp.linalg.norm(y2 - y2_ref) / (jnp.linalg.norm(y2_ref) + 1e-12))
    assert rel2 < 5e-2, rel2

    print("KERNEL_OK")
</pallas_src>

<mosaic_0001>
module attributes {stable_mosaic.version = 11 : i64} {
  func.func @admm_resnet_kernel(%arg0: i32, %arg1: memref<1x4x256xf32, #tpu.memory_space<vmem>>, %arg2: memref<8x4xf32, #tpu.memory_space<vmem>>, %arg3: memref<4x8xf32, #tpu.memory_space<vmem>>, %arg4: memref<4x4xf32, #tpu.memory_space<vmem>>, %arg5: memref<8x4xf32, #tpu.memory_space<vmem>>, %arg6: memref<8x1xf32, #tpu.memory_space<vmem>>, %arg7: memref<9x1x256xf32, #tpu.memory_space<vmem>>, %arg8: memref<16x72xf32, #tpu.memory_space<vmem>>, %arg9: memref<16x1xf32, #tpu.memory_space<vmem>>, %arg10: memref<16x144xf32, #tpu.memory_space<vmem>>, %arg11: memref<16x1xf32, #tpu.memory_space<vmem>>, %arg12: memref<16x144xf32, #tpu.memory_space<vmem>>, %arg13: memref<16x1xf32, #tpu.memory_space<vmem>>, %arg14: memref<4x144xf32, #tpu.memory_space<vmem>>, %arg15: memref<4x1xf32, #tpu.memory_space<vmem>>, %arg16: memref<3xf32, #tpu.memory_space<smem>>, %arg17: memref<3xf32, #tpu.memory_space<smem>>, %arg18: memref<1x4x256xf32, #tpu.memory_space<vmem>>) attributes {dimension_semantics = [#tpu.dimension_semantics<parallel>], iteration_bounds = array<i64: 2>, scalar_prefetch = 0 : i64, scratch_operands = 0 : i64, tpu.core_type = #tpu.core_type<tc>, window_params = [{transform_indices = @transform_0, window_bounds = array<i64: 1, 4, 256>}, {pipeline_mode = #tpu.pipeline_mode<synchronous>, transform_indices = @transform_1, window_bounds = array<i64: 8, 4>}, {pipeline_mode = #tpu.pipeline_mode<synchronous>, transform_indices = @transform_2, window_bounds = array<i64: 4, 8>}, {pipeline_mode = #tpu.pipeline_mode<synchronous>, transform_indices = @transform_3, window_bounds = array<i64: 4, 4>}, {pipeline_mode = #tpu.pipeline_mode<synchronous>, transform_indices = @transform_4, window_bounds = array<i64: 8, 4>}, {pipeline_mode = #tpu.pipeline_mode<synchronous>, transform_indices = @transform_5, window_bounds = array<i64: 8, 1>}, {pipeline_mode = #tpu.pipeline_mode<synchronous>, transform_indices = @transform_6, window_bounds = array<i64: 9, 1, 256>}, {pipeline_mode = #tpu.pipeline_mode<synchronous>, transform_indices = @transform_7, window_bounds = array<i64: 16, 72>}, {pipeline_mode = #tpu.pipeline_mode<synchronous>, transform_indices = @transform_8, window_bounds = array<i64: 16, 1>}, {pipeline_mode = #tpu.pipeline_mode<synchronous>, transform_indices = @transform_9, window_bounds = array<i64: 16, 144>}, {pipeline_mode = #tpu.pipeline_mode<synchronous>, transform_indices = @transform_10, window_bounds = array<i64: 16, 1>}, {pipeline_mode = #tpu.pipeline_mode<synchronous>, transform_indices = @transform_11, window_bounds = array<i64: 16, 144>}, {pipeline_mode = #tpu.pipeline_mode<synchronous>, transform_indices = @transform_12, window_bounds = array<i64: 16, 1>}, {pipeline_mode = #tpu.pipeline_mode<synchronous>, transform_indices = @transform_13, window_bounds = array<i64: 4, 144>}, {pipeline_mode = #tpu.pipeline_mode<synchronous>, transform_indices = @transform_14, window_bounds = array<i64: 4, 1>}, {transform_indices = @transform_15, window_bounds = array<i64: 3>}, {transform_indices = @transform_16, window_bounds = array<i64: 3>}, {transform_indices = @transform_17, window_bounds = array<i64: 1, 4, 256>}]} {
    %c0 = arith.constant 0 : index
    %c0_0 = arith.constant 0 : index
    %c0_1 = arith.constant 0 : index
    %0 = vector.load %arg1[%c0, %c0_0, %c0_1] : memref<1x4x256xf32, #tpu.memory_space<vmem>>, vector<1x4x256xf32>
    %1 = vector.shape_cast %0 : vector<1x4x256xf32> to vector<4x256xf32>
    %c0_2 = arith.constant 0 : index
    %c0_3 = arith.constant 0 : index
    %2 = vector.load %arg2[%c0_2, %c0_3] : memref<8x4xf32, #tpu.memory_space<vmem>>, vector<8x4xf32>
    %c0_4 = arith.constant 0 : index
    %c0_5 = arith.constant 0 : index
    %3 = vector.load %arg3[%c0_4, %c0_5] : memref<4x8xf32, #tpu.memory_space<vmem>>, vector<4x8xf32>
    %c0_6 = arith.constant 0 : index
    %c0_7 = arith.constant 0 : index
    %4 = vector.load %arg4[%c0_6, %c0_7] : memref<4x4xf32, #tpu.memory_space<vmem>>, vector<4x4xf32>
    %cst = arith.constant dense<0.000000e+00> : vector<8x256xf32>
    %5 = tpu.matmul %2, %1, %cst {dimension_numbers = #tpu.dot_dimension_numbers<[1], [0], [0], [1], [0, 0, 1, 1], [], []>} : vector<8x4xf32>, vector<4x256xf32>, vector<8x256xf32> -> vector<8x256xf32>
    %cst_8 = arith.constant dense<0.000000e+00> : vector<4x256xf32>
    %6 = tpu.matmul %3, %5, %cst_8 {dimension_numbers = #tpu.dot_dimension_numbers<[1], [0], [0], [1], [0, 0, 1, 1], [], []>} : vector<4x8xf32>, vector<8x256xf32>, vector<4x256xf32> -> vector<4x256xf32>
    %cst_9 = arith.constant 0.000000e+00 : f32
    %7 = vector.broadcast %cst_9 : f32 to vector<4x256xf32>
    %c0_10 = arith.constant 0 : index
    %8 = memref.load %arg17[%c0_10] : memref<3xf32, #tpu.memory_space<smem>>
    %c0_11 = arith.constant 0 : index
    %9 = memref.load %arg16[%c0_11] : memref<3xf32, #tpu.memory_space<smem>>
    %10 = arith.addf %6, %7 : vector<4x256xf32>
    %cst_12 = arith.constant 0.000000e+00 : f32
    %11 = arith.subf %cst_12, %8 : f32
    %12 = vector.broadcast %11 : f32 to vector<4x256xf32>
    %13 = arith.maximumf %12, %10 : vector<4x256xf32>
    %14 = vector.broadcast %8 : f32 to vector<4x256xf32>
    %15 = arith.minimumf %14, %13 : vector<4x256xf32>
    %16 = arith.subf %10, %15 : vector<4x256xf32>
    %cst_13 = arith.constant dense<0.000000e+00> : vector<4x256xf32>
    %17 = tpu.matmul %4, %6, %cst_13 {dimension_numbers = #tpu.dot_dimension_numbers<[1], [0], [0], [1], [0, 0, 1, 1], [], []>} : vector<4x4xf32>, vector<4x256xf32>, vector<4x256xf32> -> vector<4x256xf32>
    %18 = arith.subf %17, %6 : vector<4x256xf32>
    %19 = vector.broadcast %9 : f32 to vector<4x256xf32>
    %20 = arith.mulf %19, %18 : vector<4x256xf32>
    %21 = arith.subf %16, %20 : vector<4x256xf32>
    %22 = arith.addf %7, %21 : vector<4x256xf32>
    %23 = arith.subf %22, %16 : vector<4x256xf32>
    %c1 = arith.constant 1 : index
    %24 = memref.load %arg17[%c1] : memref<3xf32, #tpu.memory_space<smem>>
    %c1_14 = arith.constant 1 : index
    %25 = memref.load %arg16[%c1_14] : memref<3xf32, #tpu.memory_space<smem>>
    %26 = arith.addf %21, %23 : vector<4x256xf32>
    %cst_15 = arith.constant 0.000000e+00 : f32
    %27 = arith.subf %cst_15, %24 : f32
    %28 = vector.broadcast %27 : f32 to vector<4x256xf32>
    %29 = arith.maximumf %28, %26 : vector<4x256xf32>
    %30 = vector.broadcast %24 : f32 to vector<4x256xf32>
    %31 = arith.minimumf %30, %29 : vector<4x256xf32>
    %32 = arith.subf %26, %31 : vector<4x256xf32>
    %cst_16 = arith.constant dense<0.000000e+00> : vector<4x256xf32>
    %33 = tpu.matmul %4, %21, %cst_16 {dimension_numbers = #tpu.dot_dimension_numbers<[1], [0], [0], [1], [0, 0, 1, 1], [], []>} : vector<4x4xf32>, vector<4x256xf32>, vector<4x256xf32> -> vector<4x256xf32>
    %34 = arith.subf %33, %6 : vector<4x256xf32>
    %35 = vector.broadcast %25 : f32 to vector<4x256xf32>
    %36 = arith.mulf %35, %34 : vector<4x256xf32>
    %37 = arith.subf %32, %36 : vector<4x256xf32>
    %38 = arith.addf %23, %37 : vector<4x256xf32>
    %39 = arith.subf %38, %32 : vector<4x256xf32>
    %c2 = arith.constant 2 : index
    %40 = memref.load %arg17[%c2] : memref<3xf32, #tpu.memory_space<smem>>
    %c2_17 = arith.constant 2 : index
    %41 = memref.load %arg16[%c2_17] : memref<3xf32, #tpu.memory_space<smem>>
    %42 = arith.addf %37, %39 : vector<4x256xf32>
    %cst_18 = arith.constant 0.000000e+00 : f32
    %43 = arith.subf %cst_18, %40 : f32
    %44 = vector.broadcast %43 : f32 to vector<4x256xf32>
    %45 = arith.maximumf %44, %42 : vector<4x256xf32>
    %46 = vector.broadcast %40 : f32 to vector<4x256xf32>
    %47 = arith.minimumf %46, %45 : vector<4x256xf32>
    %48 = arith.subf %42, %47 : vector<4x256xf32>
    %cst_19 = arith.constant dense<0.000000e+00> : vector<4x256xf32>
    %49 = tpu.matmul %4, %37, %cst_19 {dimension_numbers = #tpu.dot_dimension_numbers<[1], [0], [0], [1], [0, 0, 1, 1], [], []>} : vector<4x4xf32>, vector<4x256xf32>, vector<4x256xf32> -> vector<4x256xf32>
    %50 = arith.subf %49, %6 : vector<4x256xf32>
    %51 = vector.broadcast %41 : f32 to vector<4x256xf32>
    %52 = arith.mulf %51, %50 : vector<4x256xf32>
    %53 = arith.subf %48, %52 : vector<4x256xf32>
    %c0_20 = arith.constant 0 : index
    %c0_21 = arith.constant 0 : index
    %54 = vector.load %arg5[%c0_20, %c0_21] : memref<8x4xf32, #tpu.memory_space<vmem>>, vector<8x4xf32>
    %cst_22 = arith.constant dense<0.000000e+00> : vector<8x256xf32>
    %55 = tpu.matmul %54, %53, %cst_22 {dimension_numbers = #tpu.dot_dimension_numbers<[1], [0], [0], [1], [0, 0, 1, 1], [], []>} : vector<8x4xf32>, vector<4x256xf32>, vector<8x256xf32> -> vector<8x256xf32>
    %c0_23 = arith.constant 0 : index
    %c0_24 = arith.constant 0 : index
    %56 = vector.load %arg6[%c0_23, %c0_24] : memref<8x1xf32, #tpu.memory_space<vmem>>, vector<8x1xf32>
    %57 = vector.broadcast %56 : vector<8x1xf32> to vector<8x256xf32>
    %58 = arith.addf %55, %57 : vector<8x256xf32>
    %cst_25 = arith.constant 0.000000e+00 : f32
    %59 = vector.broadcast %cst_25 : f32 to vector<8x256xf32>
    %60 = arith.maximumf %58, %59 : vector<8x256xf32>
    %c17_i32 = arith.constant 17 : i32
    %61 = tpu.dynamic_rotate %60 by %c17_i32 dim 1 : vector<8x256xf32>, i32 -> vector<8x256xf32>
    %c0_26 = arith.constant 0 : index
    %c0_27 = arith.constant 0 : index
    %c0_28 = arith.constant 0 : index
    %62 = vector.load %arg7[%c0_26, %c0_27, %c0_28] : memref<9x1x256xf32, #tpu.memory_space<vmem>>, vector<1x1x256xf32>
    %63 = vector.shape_cast %62 : vector<1x1x256xf32> to vector<1x256xf32>
    %64 = vector.broadcast %63 : vector<1x256xf32> to vector<8x256xf32>
    %65 = arith.mulf %61, %64 : vector<8x256xf32>
    %c16_i32 = arith.constant 16 : i32
    %66 = tpu.dynamic_rotate %60 by %c16_i32 dim 1 : vector<8x256xf32>, i32 -> vector<8x256xf32>
    %c1_29 = arith.constant 1 : index
    %c0_30 = arith.constant 0 : index
    %c0_31 = arith.constant 0 : index
    %67 = vector.load %arg7[%c1_29, %c0_30, %c0_31] : memref<9x1x256xf32, #tpu.memory_space<vmem>>, vector<1x1x256xf32>
    %68 = vector.shape_cast %67 : vector<1x1x256xf32> to vector<1x256xf32>
    %69 = vector.broadcast %68 : vector<1x256xf32> to vector<8x256xf32>
    %70 = arith.mulf %66, %69 : vector<8x256xf32>
    %c15_i32 = arith.constant 15 : i32
    %71 = tpu.dynamic_rotate %60 by %c15_i32 dim 1 : vector<8x256xf32>, i32 -> vector<8x256xf32>
    %c2_32 = arith.constant 2 : index
    %c0_33 = arith.constant 0 : index
    %c0_34 = arith.constant 0 : index
    %72 = vector.load %arg7[%c2_32, %c0_33, %c0_34] : memref<9x1x256xf32, #tpu.memory_space<vmem>>, vector<1x1x256xf32>
    %73 = vector.shape_cast %72 : vector<1x1x256xf32> to vector<1x256xf32>
    %74 = vector.broadcast %73 : vector<1x256xf32> to vector<8x256xf32>
    %75 = arith.mulf %71, %74 : vector<8x256xf32>
    %c1_i32 = arith.constant 1 : i32
    %76 = tpu.dynamic_rotate %60 by %c1_i32 dim 1 : vector<8x256xf32>, i32 -> vector<8x256xf32>
    %c3 = arith.constant 3 : index
    %c0_35 = arith.constant 0 : index
    %c0_36 = arith.constant 0 : index
    %77 = vector.load %arg7[%c3, %c0_35, %c0_36] : memref<9x1x256xf32, #tpu.memory_space<vmem>>, vector<1x1x256xf32>
    %78 = vector.shape_cast %77 : vector<1x1x256xf32> to vector<1x256xf32>
    %79 = vector.broadcast %78 : vector<1x256xf32> to vector<8x256xf32>
    %80 = arith.mulf %76, %79 : vector<8x256xf32>
    %c255_i32 = arith.constant 255 : i32
    %81 = tpu.dynamic_rotate %60 by %c255_i32 dim 1 : vector<8x256xf32>, i32 -> vector<8x256xf32>
    %c5 = arith.constant 5 : index
    %c0_37 = arith.constant 0 : index
    %c0_38 = arith.constant 0 : index
    %82 = vector.load %arg7[%c5, %c0_37, %c0_38] : memref<9x1x256xf32, #tpu.memory_space<vmem>>, vector<1x1x256xf32>
    %83 = vector.shape_cast %82 : vector<1x1x256xf32> to vector<1x256xf32>
    %84 = vector.broadcast %83 : vector<1x256xf32> to vector<8x256xf32>
    %85 = arith.mulf %81, %84 : vector<8x256xf32>
    %c241_i32 = arith.constant 241 : i32
    %86 = tpu.dynamic_rotate %60 by %c241_i32 dim 1 : vector<8x256xf32>, i32 -> vector<8x256xf32>
    %c6 = arith.constant 6 : index
    %c0_39 = arith.constant 0 : index
    %c0_40 = arith.constant 0 : index
    %87 = vector.load %arg7[%c6, %c0_39, %c0_40] : memref<9x1x256xf32, #tpu.memory_space<vmem>>, vector<1x1x256xf32>
    %88 = vector.shape_cast %87 : vector<1x1x256xf32> to vector<1x256xf32>
    %89 = vector.broadcast %88 : vector<1x256xf32> to vector<8x256xf32>
    %90 = arith.mulf %86, %89 : vector<8x256xf32>
    %c240_i32 = arith.constant 240 : i32
    %91 = tpu.dynamic_rotate %60 by %c240_i32 dim 1 : vector<8x256xf32>, i32 -> vector<8x256xf32>
    %c7 = arith.constant 7 : index
    %c0_41 = arith.constant 0 : index
    %c0_42 = arith.constant 0 : index
    %92 = vector.load %arg7[%c7, %c0_41, %c0_42] : memref<9x1x256xf32, #tpu.memory_space<vmem>>, vector<1x1x256xf32>
    %93 = vector.shape_cast %92 : vector<1x1x256xf32> to vector<1x256xf32>
    %94 = vector.broadcast %93 : vector<1x256xf32> to vector<8x256xf32>
    %95 = arith.mulf %91, %94 : vector<8x256xf32>
    %c239_i32 = arith.constant 239 : i32
    %96 = tpu.dynamic_rotate %60 by %c239_i32 dim 1 : vector<8x256xf32>, i32 -> vector<8x256xf32>
    %c8 = arith.constant 8 : index
    %c0_43 = arith.constant 0 : index
    %c0_44 = arith.constant 0 : index
    %97 = vector.load %arg7[%c8, %c0_43, %c0_44] : memref<9x1x256xf32, #tpu.memory_space<vmem>>, vector<1x1x256xf32>
    %98 = vector.shape_cast %97 : vector<1x1x256xf32> to vector<1x256xf32>
    %99 = vector.broadcast %98 : vector<1x256xf32> to vector<8x256xf32>
    %100 = arith.mulf %96, %99 : vector<8x256xf32>
    %101 = tpu.concatenate %65, %70, %75, %80, %60, %85, %90, %95, %100 in 0 : vector<8x256xf32>, vector<8x256xf32>, vector<8x256xf32>, vector<8x256xf32>, vector<8x256xf32>, vector<8x256xf32>, vector<8x256xf32>, vector<8x256xf32>, vector<8x256xf32> -> vector<72x256xf32>
    %c0_45 = arith.constant 0 : index
    %c0_46 = arith.constant 0 : index
    %102 = vector.load %arg8[%c0_45, %c0_46] : memref<16x72xf32, #tpu.memory_space<vmem>>, vector<16x72xf32>
    %cst_47 = arith.constant dense<0.000000e+00> : vector<16x256xf32>
    %103 = tpu.matmul %102, %101, %cst_47 {dimension_numbers = #tpu.dot_dimension_numbers<[1], [0], [0], [1], [0, 0, 1, 1], [], []>} : vector<16x72xf32>, vector<72x256xf32>, vector<16x256xf32> -> vector<16x256xf32>
    %c0_48 = arith.constant 0 : index
    %c0_49 = arith.constant 0 : index
    %104 = vector.load %arg9[%c0_48, %c0_49] : memref<16x1xf32, #tpu.memory_space<vmem>>, vector<16x1xf32>
    %105 = vector.broadcast %104 : vector<16x1xf32> to vector<16x256xf32>
    %106 = arith.addf %103, %105 : vector<16x256xf32>
    %cst_50 = arith.constant 0.000000e+00 : f32
    %107 = vector.broadcast %cst_50 : f32 to vector<16x256xf32>
    %108 = arith.maximumf %106, %107 : vector<16x256xf32>
    %c17_i32_51 = arith.constant 17 : i32
    %109 = tpu.dynamic_rotate %108 by %c17_i32_51 dim 1 : vector<16x256xf32>, i32 -> vector<16x256xf32>
    %c0_52 = arith.constant 0 : index
    %c0_53 = arith.constant 0 : index
    %c0_54 = arith.constant 0 : index
    %110 = vector.load %arg7[%c0_52, %c0_53, %c0_54] : memref<9x1x256xf32, #tpu.memory_space<vmem>>, vector<1x1x256xf32>
    %111 = vector.shape_cast %110 : vector<1x1x256xf32> to vector<1x256xf32>
    %112 = vector.broadcast %111 : vector<1x256xf32> to vector<16x256xf32>
    %113 = arith.mulf %109, %112 : vector<16x256xf32>
    %c16_i32_55 = arith.constant 16 : i32
    %114 = tpu.dynamic_rotate %108 by %c16_i32_55 dim 1 : vector<16x256xf32>, i32 -> vector<16x256xf32>
    %c1_56 = arith.constant 1 : index
    %c0_57 = arith.constant 0 : index
    %c0_58 = arith.constant 0 : index
    %115 = vector.load %arg7[%c1_56, %c0_57, %c0_58] : memref<9x1x256xf32, #tpu.memory_space<vmem>>, vector<1x1x256xf32>
    %116 = vector.shape_cast %115 : vector<1x1x256xf32> to vector<1x256xf32>
    %117 = vector.broadcast %116 : vector<1x256xf32> to vector<16x256xf32>
    %118 = arith.mulf %114, %117 : vector<16x256xf32>
    %c15_i32_59 = arith.constant 15 : i32
    %119 = tpu.dynamic_rotate %108 by %c15_i32_59 dim 1 : vector<16x256xf32>, i32 -> vector<16x256xf32>
    %c2_60 = arith.constant 2 : index
    %c0_61 = arith.constant 0 : index
    %c0_62 = arith.constant 0 : index
    %120 = vector.load %arg7[%c2_60, %c0_61, %c0_62] : memref<9x1x256xf32, #tpu.memory_space<vmem>>, vector<1x1x256xf32>
    %121 = vector.shape_cast %120 : vector<1x1x256xf32> to vector<1x256xf32>
    %122 = vector.broadcast %121 : vector<1x256xf32> to vector<16x256xf32>
    %123 = arith.mulf %119, %122 : vector<16x256xf32>
    %c1_i32_63 = arith.constant 1 : i32
    %124 = tpu.dynamic_rotate %108 by %c1_i32_63 dim 1 : vector<16x256xf32>, i32 -> vector<16x256xf32>
    %c3_64 = arith.constant 3 : index
    %c0_65 = arith.constant 0 : index
    %c0_66 = arith.constant 0 : index
    %125 = vector.load %arg7[%c3_64, %c0_65, %c0_66] : memref<9x1x256xf32, #tpu.memory_space<vmem>>, vector<1x1x256xf32>
    %126 = vector.shape_cast %125 : vector<1x1x256xf32> to vector<1x256xf32>
    %127 = vector.broadcast %126 : vector<1x256xf32> to vector<16x256xf32>
    %128 = arith.mulf %124, %127 : vector<16x256xf32>
    %c255_i32_67 = arith.constant 255 : i32
    %129 = tpu.dynamic_rotate %108 by %c255_i32_67 dim 1 : vector<16x256xf32>, i32 -> vector<16x256xf32>
    %c5_68 = arith.constant 5 : index
    %c0_69 = arith.constant 0 : index
    %c0_70 = arith.constant 0 : index
    %130 = vector.load %arg7[%c5_68, %c0_69, %c0_70] : memref<9x1x256xf32, #tpu.memory_space<vmem>>, vector<1x1x256xf32>
    %131 = vector.shape_cast %130 : vector<1x1x256xf32> to vector<1x256xf32>
    %132 = vector.broadcast %131 : vector<1x256xf32> to vector<16x256xf32>
    %133 = arith.mulf %129, %132 : vector<16x256xf32>
    %c241_i32_71 = arith.constant 241 : i32
    %134 = tpu.dynamic_rotate %108 by %c241_i32_71 dim 1 : vector<16x256xf32>, i32 -> vector<16x256xf32>
    %c6_72 = arith.constant 6 : index
    %c0_73 = arith.constant 0 : index
    %c0_74 = arith.constant 0 : index
    %135 = vector.load %arg7[%c6_72, %c0_73, %c0_74] : memref<9x1x256xf32, #tpu.memory_space<vmem>>, vector<1x1x256xf32>
    %136 = vector.shape_cast %135 : vector<1x1x256xf32> to vector<1x256xf32>
    %137 = vector.broadcast %136 : vector<1x256xf32> to vector<16x256xf32>
    %138 = arith.mulf %134, %137 : vector<16x256xf32>
    %c240_i32_75 = arith.constant 240 : i32
    %139 = tpu.dynamic_rotate %108 by %c240_i32_75 dim 1 : vector<16x256xf32>, i32 -> vector<16x256xf32>
    %c7_76 = arith.constant 7 : index
    %c0_77 = arith.constant 0 : index
    %c0_78 = arith.constant 0 : index
    %140 = vector.load %arg7[%c7_76, %c0_77, %c0_78] : memref<9x1x256xf32, #tpu.memory_space<vmem>>, vector<1x1x256xf32>
    %141 = vector.shape_cast %140 : vector<1x1x256xf32> to vector<1x256xf32>
    %142 = vector.broadcast %141 : vector<1x256xf32> to vector<16x256xf32>
    %143 = arith.mulf %139, %142 : vector<16x256xf32>
    %c239_i32_79 = arith.constant 239 : i32
    %144 = tpu.dynamic_rotate %108 by %c239_i32_79 dim 1 : vector<16x256xf32>, i32 -> vector<16x256xf32>
    %c8_80 = arith.constant 8 : index
    %c0_81 = arith.constant 0 : index
    %c0_82 = arith.constant 0 : index
    %145 = vector.load %arg7[%c8_80, %c0_81, %c0_82] : memref<9x1x256xf32, #tpu.memory_space<vmem>>, vector<1x1x256xf32>
    %146 = vector.shape_cast %145 : vector<1x1x256xf32> to vector<1x256xf32>
    %147 = vector.broadcast %146 : vector<1x256xf32> to vector<16x256xf32>
    %148 = arith.mulf %144, %147 : vector<16x256xf32>
    %149 = tpu.concatenate %113, %118, %123, %128, %108, %133, %138, %143, %148 in 0 : vector<16x256xf32>, vector<16x256xf32>, vector<16x256xf32>, vector<16x256xf32>, vector<16x256xf32>, vector<16x256xf32>, vector<16x256xf32>, vector<16x256xf32>, vector<16x256xf32> -> vector<144x256xf32>
    %c0_83 = arith.constant 0 : index
    %c0_84 = arith.constant 0 : index
    %150 = vector.load %arg10[%c0_83, %c0_84] : memref<16x144xf32, #tpu.memory_space<vmem>>, vector<16x144xf32>
    %cst_85 = arith.constant dense<0.000000e+00> : vector<16x256xf32>
    %151 = tpu.matmul %150, %149, %cst_85 {dimension_numbers = #tpu.dot_dimension_numbers<[1], [0], [0], [1], [0, 0, 1, 1], [], []>} : vector<16x144xf32>, vector<144x256xf32>, vector<16x256xf32> -> vector<16x256xf32>
    %c0_86 = arith.constant 0 : index
    %c0_87 = arith.constant 0 : index
    %152 = vector.load %arg11[%c0_86, %c0_87] : memref<16x1xf32, #tpu.memory_space<vmem>>, vector<16x1xf32>
    %153 = vector.broadcast %152 : vector<16x1xf32> to vector<16x256xf32>
    %154 = arith.addf %151, %153 : vector<16x256xf32>
    %cst_88 = arith.constant 0.000000e+00 : f32
    %155 = vector.broadcast %cst_88 : f32 to vector<16x256xf32>
    %156 = arith.maximumf %154, %155 : vector<16x256xf32>
    %c17_i32_89 = arith.constant 17 : i32
    %157 = tpu.dynamic_rotate %156 by %c17_i32_89 dim 1 : vector<16x256xf32>, i32 -> vector<16x256xf32>
    %c0_90 = arith.constant 0 : index
    %c0_91 = arith.constant 0 : index
    %c0_92 = arith.constant 0 : index
    %158 = vector.load %arg7[%c0_90, %c0_91, %c0_92] : memref<9x1x256xf32, #tpu.memory_space<vmem>>, vector<1x1x256xf32>
    %159 = vector.shape_cast %158 : vector<1x1x256xf32> to vector<1x256xf32>
    %160 = vector.broadcast %159 : vector<1x256xf32> to vector<16x256xf32>
    %161 = arith.mulf %157, %160 : vector<16x256xf32>
    %c16_i32_93 = arith.constant 16 : i32
    %162 = tpu.dynamic_rotate %156 by %c16_i32_93 dim 1 : vector<16x256xf32>, i32 -> vector<16x256xf32>
    %c1_94 = arith.constant 1 : index
    %c0_95 = arith.constant 0 : index
    %c0_96 = arith.constant 0 : index
    %163 = vector.load %arg7[%c1_94, %c0_95, %c0_96] : memref<9x1x256xf32, #tpu.memory_space<vmem>>, vector<1x1x256xf32>
    %164 = vector.shape_cast %163 : vector<1x1x256xf32> to vector<1x256xf32>
    %165 = vector.broadcast %164 : vector<1x256xf32> to vector<16x256xf32>
    %166 = arith.mulf %162, %165 : vector<16x256xf32>
    %c15_i32_97 = arith.constant 15 : i32
    %167 = tpu.dynamic_rotate %156 by %c15_i32_97 dim 1 : vector<16x256xf32>, i32 -> vector<16x256xf32>
    %c2_98 = arith.constant 2 : index
    %c0_99 = arith.constant 0 : index
    %c0_100 = arith.constant 0 : index
    %168 = vector.load %arg7[%c2_98, %c0_99, %c0_100] : memref<9x1x256xf32, #tpu.memory_space<vmem>>, vector<1x1x256xf32>
    %169 = vector.shape_cast %168 : vector<1x1x256xf32> to vector<1x256xf32>
    %170 = vector.broadcast %169 : vector<1x256xf32> to vector<16x256xf32>
    %171 = arith.mulf %167, %170 : vector<16x256xf32>
    %c1_i32_101 = arith.constant 1 : i32
    %172 = tpu.dynamic_rotate %156 by %c1_i32_101 dim 1 : vector<16x256xf32>, i32 -> vector<16x256xf32>
    %c3_102 = arith.constant 3 : index
    %c0_103 = arith.constant 0 : index
    %c0_104 = arith.constant 0 : index
    %173 = vector.load %arg7[%c3_102, %c0_103, %c0_104] : memref<9x1x256xf32, #tpu.memory_space<vmem>>, vector<1x1x256xf32>
    %174 = vector.shape_cast %173 : vector<1x1x256xf32> to vector<1x256xf32>
    %175 = vector.broadcast %174 : vector<1x256xf32> to vector<16x256xf32>
    %176 = arith.mulf %172, %175 : vector<16x256xf32>
    %c255_i32_105 = arith.constant 255 : i32
    %177 = tpu.dynamic_rotate %156 by %c255_i32_105 dim 1 : vector<16x256xf32>, i32 -> vector<16x256xf32>
    %c5_106 = arith.constant 5 : index
    %c0_107 = arith.constant 0 : index
    %c0_108 = arith.constant 0 : index
    %178 = vector.load %arg7[%c5_106, %c0_107, %c0_108] : memref<9x1x256xf32, #tpu.memory_space<vmem>>, vector<1x1x256xf32>
    %179 = vector.shape_cast %178 : vector<1x1x256xf32> to vector<1x256xf32>
    %180 = vector.broadcast %179 : vector<1x256xf32> to vector<16x256xf32>
    %181 = arith.mulf %177, %180 : vector<16x256xf32>
    %c241_i32_109 = arith.constant 241 : i32
    %182 = tpu.dynamic_rotate %156 by %c241_i32_109 dim 1 : vector<16x256xf32>, i32 -> vector<16x256xf32>
    %c6_110 = arith.constant 6 : index
    %c0_111 = arith.constant 0 : index
    %c0_112 = arith.constant 0 : index
    %183 = vector.load %arg7[%c6_110, %c0_111, %c0_112] : memref<9x1x256xf32, #tpu.memory_space<vmem>>, vector<1x1x256xf32>
    %184 = vector.shape_cast %183 : vector<1x1x256xf32> to vector<1x256xf32>
    %185 = vector.broadcast %184 : vector<1x256xf32> to vector<16x256xf32>
    %186 = arith.mulf %182, %185 : vector<16x256xf32>
    %c240_i32_113 = arith.constant 240 : i32
    %187 = tpu.dynamic_rotate %156 by %c240_i32_113 dim 1 : vector<16x256xf32>, i32 -> vector<16x256xf32>
    %c7_114 = arith.constant 7 : index
    %c0_115 = arith.constant 0 : index
    %c0_116 = arith.constant 0 : index
    %188 = vector.load %arg7[%c7_114, %c0_115, %c0_116] : memref<9x1x256xf32, #tpu.memory_space<vmem>>, vector<1x1x256xf32>
    %189 = vector.shape_cast %188 : vector<1x1x256xf32> to vector<1x256xf32>
    %190 = vector.broadcast %189 : vector<1x256xf32> to vector<16x256xf32>
    %191 = arith.mulf %187, %190 : vector<16x256xf32>
    %c239_i32_117 = arith.constant 239 : i32
    %192 = tpu.dynamic_rotate %156 by %c239_i32_117 dim 1 : vector<16x256xf32>, i32 -> vector<16x256xf32>
    %c8_118 = arith.constant 8 : index
    %c0_119 = arith.constant 0 : index
    %c0_120 = arith.constant 0 : index
    %193 = vector.load %arg7[%c8_118, %c0_119, %c0_120] : memref<9x1x256xf32, #tpu.memory_space<vmem>>, vector<1x1x256xf32>
    %194 = vector.shape_cast %193 : vector<1x1x256xf32> to vector<1x256xf32>
    %195 = vector.broadcast %194 : vector<1x256xf32> to vector<16x256xf32>
    %196 = arith.mulf %192, %195 : vector<16x256xf32>
    %197 = tpu.concatenate %161, %166, %171, %176, %156, %181, %186, %191, %196 in 0 : vector<16x256xf32>, vector<16x256xf32>, vector<16x256xf32>, vector<16x256xf32>, vector<16x256xf32>, vector<16x256xf32>, vector<16x256xf32>, vector<16x256xf32>, vector<16x256xf32> -> vector<144x256xf32>
    %c0_121 = arith.constant 0 : index
    %c0_122 = arith.constant 0 : index
    %198 = vector.load %arg12[%c0_121, %c0_122] : memref<16x144xf32, #tpu.memory_space<vmem>>, vector<16x144xf32>
    %cst_123 = arith.constant dense<0.000000e+00> : vector<16x256xf32>
    %199 = tpu.matmul %198, %197, %cst_123 {dimension_numbers = #tpu.dot_dimension_numbers<[1], [0], [0], [1], [0, 0, 1, 1], [], []>} : vector<16x144xf32>, vector<144x256xf32>, vector<16x256xf32> -> vector<16x256xf32>
    %c0_124 = arith.constant 0 : index
    %c0_125 = arith.constant 0 : index
    %200 = vector.load %arg13[%c0_124, %c0_125] : memref<16x1xf32, #tpu.memory_space<vmem>>, vector<16x1xf32>
    %201 = vector.broadcast %200 : vector<16x1xf32> to vector<16x256xf32>
    %202 = arith.addf %199, %201 : vector<16x256xf32>
    %203 = arith.addf %108, %202 : vector<16x256xf32>
    %cst_126 = arith.constant 0.000000e+00 : f32
    %204 = vector.broadcast %cst_126 : f32 to vector<16x256xf32>
    %205 = arith.maximumf %203, %204 : vector<16x256xf32>
    %c17_i32_127 = arith.constant 17 : i32
    %206 = tpu.dynamic_rotate %205 by %c17_i32_127 dim 1 : vector<16x256xf32>, i32 -> vector<16x256xf32>
    %c0_128 = arith.constant 0 : index
    %c0_129 = arith.constant 0 : index
    %c0_130 = arith.constant 0 : index
    %207 = vector.load %arg7[%c0_128, %c0_129, %c0_130] : memref<9x1x256xf32, #tpu.memory_space<vmem>>, vector<1x1x256xf32>
    %208 = vector.shape_cast %207 : vector<1x1x256xf32> to vector<1x256xf32>
    %209 = vector.broadcast %208 : vector<1x256xf32> to vector<16x256xf32>
    %210 = arith.mulf %206, %209 : vector<16x256xf32>
    %c16_i32_131 = arith.constant 16 : i32
    %211 = tpu.dynamic_rotate %205 by %c16_i32_131 dim 1 : vector<16x256xf32>, i32 -> vector<16x256xf32>
    %c1_132 = arith.constant 1 : index
    %c0_133 = arith.constant 0 : index
    %c0_134 = arith.constant 0 : index
    %212 = vector.load %arg7[%c1_132, %c0_133, %c0_134] : memref<9x1x256xf32, #tpu.memory_space<vmem>>, vector<1x1x256xf32>
    %213 = vector.shape_cast %212 : vector<1x1x256xf32> to vector<1x256xf32>
    %214 = vector.broadcast %213 : vector<1x256xf32> to vector<16x256xf32>
    %215 = arith.mulf %211, %214 : vector<16x256xf32>
    %c15_i32_135 = arith.constant 15 : i32
    %216 = tpu.dynamic_rotate %205 by %c15_i32_135 dim 1 : vector<16x256xf32>, i32 -> vector<16x256xf32>
    %c2_136 = arith.constant 2 : index
    %c0_137 = arith.constant 0 : index
    %c0_138 = arith.constant 0 : index
    %217 = vector.load %arg7[%c2_136, %c0_137, %c0_138] : memref<9x1x256xf32, #tpu.memory_space<vmem>>, vector<1x1x256xf32>
    %218 = vector.shape_cast %217 : vector<1x1x256xf32> to vector<1x256xf32>
    %219 = vector.broadcast %218 : vector<1x256xf32> to vector<16x256xf32>
    %220 = arith.mulf %216, %219 : vector<16x256xf32>
    %c1_i32_139 = arith.constant 1 : i32
    %221 = tpu.dynamic_rotate %205 by %c1_i32_139 dim 1 : vector<16x256xf32>, i32 -> vector<16x256xf32>
    %c3_140 = arith.constant 3 : index
    %c0_141 = arith.constant 0 : index
    %c0_142 = arith.constant 0 : index
    %222 = vector.load %arg7[%c3_140, %c0_141, %c0_142] : memref<9x1x256xf32, #tpu.memory_space<vmem>>, vector<1x1x256xf32>
    %223 = vector.shape_cast %222 : vector<1x1x256xf32> to vector<1x256xf32>
    %224 = vector.broadcast %223 : vector<1x256xf32> to vector<16x256xf32>
    %225 = arith.mulf %221, %224 : vector<16x256xf32>
    %c255_i32_143 = arith.constant 255 : i32
    %226 = tpu.dynamic_rotate %205 by %c255_i32_143 dim 1 : vector<16x256xf32>, i32 -> vector<16x256xf32>
    %c5_144 = arith.constant 5 : index
    %c0_145 = arith.constant 0 : index
    %c0_146 = arith.constant 0 : index
    %227 = vector.load %arg7[%c5_144, %c0_145, %c0_146] : memref<9x1x256xf32, #tpu.memory_space<vmem>>, vector<1x1x256xf32>
    %228 = vector.shape_cast %227 : vector<1x1x256xf32> to vector<1x256xf32>
    %229 = vector.broadcast %228 : vector<1x256xf32> to vector<16x256xf32>
    %230 = arith.mulf %226, %229 : vector<16x256xf32>
    %c241_i32_147 = arith.constant 241 : i32
    %231 = tpu.dynamic_rotate %205 by %c241_i32_147 dim 1 : vector<16x256xf32>, i32 -> vector<16x256xf32>
    %c6_148 = arith.constant 6 : index
    %c0_149 = arith.constant 0 : index
    %c0_150 = arith.constant 0 : index
    %232 = vector.load %arg7[%c6_148, %c0_149, %c0_150] : memref<9x1x256xf32, #tpu.memory_space<vmem>>, vector<1x1x256xf32>
    %233 = vector.shape_cast %232 : vector<1x1x256xf32> to vector<1x256xf32>
    %234 = vector.broadcast %233 : vector<1x256xf32> to vector<16x256xf32>
    %235 = arith.mulf %231, %234 : vector<16x256xf32>
    %c240_i32_151 = arith.constant 240 : i32
    %236 = tpu.dynamic_rotate %205 by %c240_i32_151 dim 1 : vector<16x256xf32>, i32 -> vector<16x256xf32>
    %c7_152 = arith.constant 7 : index
    %c0_153 = arith.constant 0 : index
    %c0_154 = arith.constant 0 : index
    %237 = vector.load %arg7[%c7_152, %c0_153, %c0_154] : memref<9x1x256xf32, #tpu.memory_space<vmem>>, vector<1x1x256xf32>
    %238 = vector.shape_cast %237 : vector<1x1x256xf32> to vector<1x256xf32>
    %239 = vector.broadcast %238 : vector<1x256xf32> to vector<16x256xf32>
    %240 = arith.mulf %236, %239 : vector<16x256xf32>
    %c239_i32_155 = arith.constant 239 : i32
    %241 = tpu.dynamic_rotate %205 by %c239_i32_155 dim 1 : vector<16x256xf32>, i32 -> vector<16x256xf32>
    %c8_156 = arith.constant 8 : index
    %c0_157 = arith.constant 0 : index
    %c0_158 = arith.constant 0 : index
    %242 = vector.load %arg7[%c8_156, %c0_157, %c0_158] : memref<9x1x256xf32, #tpu.memory_space<vmem>>, vector<1x1x256xf32>
    %243 = vector.shape_cast %242 : vector<1x1x256xf32> to vector<1x256xf32>
    %244 = vector.broadcast %243 : vector<1x256xf32> to vector<16x256xf32>
    %245 = arith.mulf %241, %244 : vector<16x256xf32>
    %246 = tpu.concatenate %210, %215, %220, %225, %205, %230, %235, %240, %245 in 0 : vector<16x256xf32>, vector<16x256xf32>, vector<16x256xf32>, vector<16x256xf32>, vector<16x256xf32>, vector<16x256xf32>, vector<16x256xf32>, vector<16x256xf32>, vector<16x256xf32> -> vector<144x256xf32>
    %c0_159 = arith.constant 0 : index
    %c0_160 = arith.constant 0 : index
    %247 = vector.load %arg14[%c0_159, %c0_160] : memref<4x144xf32, #tpu.memory_space<vmem>>, vector<4x144xf32>
    %cst_161 = arith.constant dense<0.000000e+00> : vector<4x256xf32>
    %248 = tpu.matmul %247, %246, %cst_161 {dimension_numbers = #tpu.dot_dimension_numbers<[1], [0], [0], [1], [0, 0, 1, 1], [], []>} : vector<4x144xf32>, vector<144x256xf32>, vector<4x256xf32> -> vector<4x256xf32>
    %c0_162 = arith.constant 0 : index
    %c0_163 = arith.constant 0 : index
    %249 = vector.load %arg15[%c0_162, %c0_163] : memref<4x1xf32, #tpu.memory_space<vmem>>, vector<4x1xf32>
    %250 = vector.broadcast %249 : vector<4x1xf32> to vector<4x256xf32>
    %251 = arith.addf %248, %250 : vector<4x256xf32>
    %c0_164 = arith.constant 0 : index
    %c0_165 = arith.constant 0 : index
    %c0_166 = arith.constant 0 : index
    %252 = vector.load %arg18[%c0_164, %c0_165, %c0_166] : memref<1x4x256xf32, #tpu.memory_space<vmem>>, vector<1x4x256xf32>
    %253 = vector.shape_cast %252 : vector<1x4x256xf32> to vector<4x256xf32>
    %254 = vector.shape_cast %251 : vector<4x256xf32> to vector<1x4x256xf32>
    tpu.vector_store %arg18[%c0_164, %c0_165, %c0_166], %254 {strides = array<i32>} : memref<1x4x256xf32, #tpu.memory_space<vmem>>, vector<1x4x256xf32>,
    return
  }
  func.func @transform_0(%arg0: i32) -> (i32, i32, i32) {
    %c0_i32 = arith.constant 0 : i32
    %c0_i32_0 = arith.constant 0 : i32
    %c0_i32_1 = arith.constant 0 : i32
    return %arg0, %c0_i32, %c0_i32_0 : i32, i32, i32
  }
  func.func @transform_1(%arg0: i32) -> (i32, i32) {
    %c0_i32 = arith.constant 0 : i32
    %c0_i32_0 = arith.constant 0 : i32
    %c0_i32_1 = arith.constant 0 : i32
    return %c0_i32, %c0_i32_0 : i32, i32
  }
  func.func @transform_2(%arg0: i32) -> (i32, i32) {
    %c0_i32 = arith.constant 0 : i32
    %c0_i32_0 = arith.constant 0 : i32
    %c0_i32_1 = arith.constant 0 : i32
    return %c0_i32, %c0_i32_0 : i32, i32
  }
  func.func @transform_3(%arg0: i32) -> (i32, i32) {
    %c0_i32 = arith.constant 0 : i32
    %c0_i32_0 = arith.constant 0 : i32
    %c0_i32_1 = arith.constant 0 : i32
    return %c0_i32, %c0_i32_0 : i32, i32
  }
  func.func @transform_4(%arg0: i32) -> (i32, i32) {
    %c0_i32 = arith.constant 0 : i32
    %c0_i32_0 = arith.constant 0 : i32
    %c0_i32_1 = arith.constant 0 : i32
    return %c0_i32, %c0_i32_0 : i32, i32
  }
  func.func @transform_5(%arg0: i32) -> (i32, i32) {
    %c0_i32 = arith.constant 0 : i32
    %c0_i32_0 = arith.constant 0 : i32
    %c0_i32_1 = arith.constant 0 : i32
    return %c0_i32, %c0_i32_0 : i32, i32
  }
  func.func @transform_6(%arg0: i32) -> (i32, i32, i32) {
    %c0_i32 = arith.constant 0 : i32
    %c0_i32_0 = arith.constant 0 : i32
    %c0_i32_1 = arith.constant 0 : i32
    %c0_i32_2 = arith.constant 0 : i32
    return %c0_i32, %c0_i32_0, %c0_i32_1 : i32, i32, i32
  }
  func.func @transform_7(%arg0: i32) -> (i32, i32) {
    %c0_i32 = arith.constant 0 : i32
    %c0_i32_0 = arith.constant 0 : i32
    %c0_i32_1 = arith.constant 0 : i32
    return %c0_i32, %c0_i32_0 : i32, i32
  }
  func.func @transform_8(%arg0: i32) -> (i32, i32) {
    %c0_i32 = arith.constant 0 : i32
    %c0_i32_0 = arith.constant 0 : i32
    %c0_i32_1 = arith.constant 0 : i32
    return %c0_i32, %c0_i32_0 : i32, i32
  }
  func.func @transform_9(%arg0: i32) -> (i32, i32) {
    %c0_i32 = arith.constant 0 : i32
    %c0_i32_0 = arith.constant 0 : i32
    %c0_i32_1 = arith.constant 0 : i32
    return %c0_i32, %c0_i32_0 : i32, i32
  }
  func.func @transform_10(%arg0: i32) -> (i32, i32) {
    %c0_i32 = arith.constant 0 : i32
    %c0_i32_0 = arith.constant 0 : i32
    %c0_i32_1 = arith.constant 0 : i32
    return %c0_i32, %c0_i32_0 : i32, i32
  }
  func.func @transform_11(%arg0: i32) -> (i32, i32) {
    %c0_i32 = arith.constant 0 : i32
    %c0_i32_0 = arith.constant 0 : i32
    %c0_i32_1 = arith.constant 0 : i32
    return %c0_i32, %c0_i32_0 : i32, i32
  }
  func.func @transform_12(%arg0: i32) -> (i32, i32) {
    %c0_i32 = arith.constant 0 : i32
    %c0_i32_0 = arith.constant 0 : i32
    %c0_i32_1 = arith.constant 0 : i32
    return %c0_i32, %c0_i32_0 : i32, i32
  }
  func.func @transform_13(%arg0: i32) -> (i32, i32) {
    %c0_i32 = arith.constant 0 : i32
    %c0_i32_0 = arith.constant 0 : i32
    %c0_i32_1 = arith.constant 0 : i32
    return %c0_i32, %c0_i32_0 : i32, i32
  }
  func.func @transform_14(%arg0: i32) -> (i32, i32) {
    %c0_i32 = arith.constant 0 : i32
    %c0_i32_0 = arith.constant 0 : i32
    %c0_i32_1 = arith.constant 0 : i32
    return %c0_i32, %c0_i32_0 : i32, i32
  }
  func.func @transform_15(%arg0: i32) -> i32 {
    %c0_i32 = arith.constant 0 : i32
    %c0_i32_0 = arith.constant 0 : i32
    return %c0_i32 : i32
  }
  func.func @transform_16(%arg0: i32) -> i32 {
    %c0_i32 = arith.constant 0 : i32
    %c0_i32_0 = arith.constant 0 : i32
    return %c0_i32 : i32
  }
  func.func @transform_17(%arg0: i32) -> (i32, i32, i32) {
    %c0_i32 = arith.constant 0 : i32
    %c0_i32_0 = arith.constant 0 : i32
    %c0_i32_1 = arith.constant 0 : i32
    return %arg0, %c0_i32, %c0_i32_0 : i32, i32, i32
  }
}

</mosaic_0001>

<llo_original>
// kernel: admm_resnet_forward.1
$region0: #{admm_resnet_forward.1}
  #allocation0 [shape = 'u32[]', space=smem, size = 0x4, offset = 0x4, fixed_abs, tag = 'smem constant byte address 0x4 - core index']
  #allocation1 [shape = 'u32[72,128]{1,0:T(1,128)}', space=vmem, size = 0x9000, scoped, tag = 'internal scratch']
  %s0 = inlined_call_operand.vmem [shape: f32[2,4,256], index: 0, kind: input, shape index: {}]
  %s1 = inlined_call_operand.vmem [shape: f32[8,4], index: 1, kind: input, shape index: {}]
  %s2 = inlined_call_operand.vmem [shape: f32[4,8], index: 2, kind: input, shape index: {}]
  %s3 = inlined_call_operand.vmem [shape: f32[4,4], index: 3, kind: input, shape index: {}]
  %s4 = inlined_call_operand.vmem [shape: f32[8,4], index: 4, kind: input, shape index: {}]
  %s5 = inlined_call_operand.vmem [shape: f32[8,1], index: 5, kind: input, shape index: {}]
  %s6 = inlined_call_operand.vmem [shape: f32[9,1,256], index: 6, kind: input, shape index: {}]
  %s7 = inlined_call_operand.vmem [shape: f32[16,72], index: 7, kind: input, shape index: {}]
  %s8 = inlined_call_operand.vmem [shape: f32[16,1], index: 8, kind: input, shape index: {}]
  %s9 = inlined_call_operand.vmem [shape: f32[16,144], index: 9, kind: input, shape index: {}]
  %s10 = inlined_call_operand.vmem [shape: f32[16,1], index: 10, kind: input, shape index: {}]
  %s11 = inlined_call_operand.vmem [shape: f32[16,144], index: 11, kind: input, shape index: {}]
  %s12 = inlined_call_operand.vmem [shape: f32[16,1], index: 12, kind: input, shape index: {}]
  %s13 = inlined_call_operand.vmem [shape: f32[4,144], index: 13, kind: input, shape index: {}]
  %s14 = inlined_call_operand.vmem [shape: f32[4,1], index: 14, kind: input, shape index: {}]
  %s15 = inlined_call_operand.vmem [shape: f32[3], index: 15, kind: input, shape index: {}]
  %s16 = inlined_call_operand.vmem [shape: f32[3], index: 16, kind: input, shape index: {}]
  %s17 = inlined_call_operand.vmem [shape: f32[2,4,256], index: 17, kind: output, shape index: {}]
  %s18 = sld [smem:[#allocation0]]
  $region109: #{admm_resnet_forward.1} parent=0
    _
  %s20 = ssub.s32 1, %s18
  %s21 = scalar_select 0, %s20, %s18
  $region1: #{admm_resnet_forward.1} parent=0
    #allocation2 [shape = 'u8[512]{0}', space=smem, size = 0x200, scoped, tag = 'input window, operand 15, single buffered']
    #allocation3 [shape = 's32[2]{0}', space=sflag, size = 0x8, scoped, tag = 'scoped memory for admm_resnet_forward.1']
    #allocation4 [shape = 'u8[512]{0}', space=smem, size = 0x200, scoped, tag = 'input window, operand 16, single buffered']
    #allocation5 [shape = 's32[1]{0}', space=sflag, size = 0x4, scoped, tag = 'scoped memory for admm_resnet_forward.1']
    %22 = vsyncpa [#allocation3], 0
    %23 = vsyncpa [#allocation5], 0
    loop: start=0, step=1, limit=4
    $region2: #{admm_resnet_forward.1} parent=1 // loop_pre_header
      _
    $region3: #{admm_resnet_forward.1} parent=1 // loop_header
      %s25 = sphi 0, %s29
      %p26 = scmp.ge.s32.totalorder %s25, 4
      %s35 = sphi 0, %s37
      %s38 = sphi 0, %s35
      %s39 = sphi 0, %s38
      %s55 = sphi 0, %s39
      %s59 = sphi 0, %s59
      %s61 = sphi 0, %s59
      %s62 = sphi 0, %s61
      %s76 = sphi 0, %s62
      %s80 = sphi 0, %s80
      %s82 = sphi 0, %s80
      %s83 = sphi 0, %s82
      %s97 = sphi 0, %s83
      %s101 = sphi 0, %s101
      %s103 = sphi 0, %s101
      %s104 = sphi 0, %s103
      %s118 = sphi 0, %s104
      %s122 = sphi 0, %s122
      %s124 = sphi 0, %s122
      %s125 = sphi 0, %s124
      %s139 = sphi 0, %s125
      %s143 = sphi 0, %s143
      %s145 = sphi 0, %s143
      %s146 = sphi 0, %s145
      %s160 = sphi 0, %s146
      %s164 = sphi 0, %s164
      %s166 = sphi 0, %s164
      %s167 = sphi 0, %s166
      %s181 = sphi 0, %s167
      %s185 = sphi 0, %s185
      %s187 = sphi 0, %s185
      %s188 = sphi 0, %s187
      %s202 = sphi 0, %s188
      %s206 = sphi 0, %s206
      %s208 = sphi 0, %s206
      %s209 = sphi 0, %s208
      %s223 = sphi 0, %s209
      %s227 = sphi 0, %s227
      %s229 = sphi 0, %s227
      %s230 = sphi 0, %s229
      %s244 = sphi 0, %s230
      %s248 = sphi 0, %s248
      %s250 = sphi 0, %s248
      %s251 = sphi 0, %s250
      %s265 = sphi 0, %s251
      %s269 = sphi 0, %s269
      %s271 = sphi 0, %s269
      %s272 = sphi 0, %s271
      %s286 = sphi 0, %s272
      %s290 = sphi 0, %s290
      %s292 = sphi 0, %s290
      %s293 = sphi 0, %s292
      %s307 = sphi 0, %s293
      %s311 = sphi 0, %s311
      %s313 = sphi 0, %s311
      %s314 = sphi 0, %s313
      %s328 = sphi 0, %s314
      %s332 = sphi 0, %s332
      %s334 = sphi 0, %s332
      %s335 = sphi 0, %s334
      %s349 = sphi 0, %s335
      %s353 = sphi 0, %s353
      %s355 = sphi 0, %s353
      %s356 = sphi 0, %s355
      %s370 = sphi 0, %s356
      %s374 = sphi 0, %s374
      %s376 = sphi 0, %s374
      %s377 = sphi 0, %s376
      %s391 = sphi 0, %s377
      %s397 = sphi 0, %s399
      %s400 = sphi 0, %s397
      %s401 = sphi 0, %s400
      %s417 = sphi 0, %s401
    $region4: #{admm_resnet_forward.1} parent=1 // loop_header_branch
      %28 = sbr.rel (%p26) target = $region8
    $region5: #{admm_resnet_forward.1} parent=1 // loop_body
      %s30 = ssub.s32 %s25, 1
      %s31 = ssub.s32 %s25, 2
      %s32 = sadd.s32 %s25, 1
      %s33 = ssub.s32 %s25, %s32
      %p34 = scmp.eq.s32.totalorder %s33, 0
      %s36 = sadd.s32 %s35, 1
      %s37 = scalar_select %p34, %s35, %s36
      %p40 = pneg %p34
      %p41 = scmp.eq.s32.totalorder %s25, 1
      %p42 = por %p40, %p41
      %p43 = scmp.ne.s32.totalorder %s35, %s38
      %p44 = scmp.eq.s32.totalorder %s25, 0
      %p45 = por %p43, %p44
      %p46 = scmp.ne.s32.totalorder %s35, %s38
      %p47 = scmp.eq.s32.totalorder %s30, 1
      %p48 = por %p46, %p47
      %p49 = scmp.ne.s32.totalorder %s38, %s39
      %p50 = scmp.eq.s32.totalorder %s30, 0
      %p51 = por %p49, %p50
      %p52 = scmp.ne.s32.totalorder %s38, %s39
      %p53 = scmp.eq.s32.totalorder %s31, 1
      %p54 = por %p52, %p53
      %p56 = scmp.ne.s32.totalorder %s39, %s55
      %p57 = scmp.eq.s32.totalorder %s31, 0
      %p58 = por %p56, %p57
      %s60 = sadd.s32 %s59, 1
      %p63 = scmp.eq.s32.totalorder %s25, 1
      %p64 = scmp.ne.s32.totalorder %s59, %s61
      %p65 = scmp.eq.s32.totalorder %s25, 0
      %p66 = por %p64, %p65
      %p67 = scmp.ne.s32.totalorder %s59, %s61
      %p68 = scmp.eq.s32.totalorder %s30, 1
      %p69 = por %p67, %p68
      %p70 = scmp.ne.s32.totalorder %s61, %s62
      %p71 = scmp.eq.s32.totalorder %s30, 0
      %p72 = por %p70, %p71
      %p73 = scmp.ne.s32.totalorder %s61, %s62
      %p74 = scmp.eq.s32.totalorder %s31, 1
      %p75 = por %p73, %p74
      %p77 = scmp.ne.s32.totalorder %s62, %s76
      %p78 = scmp.eq.s32.totalorder %s31, 0
      %p79 = por %p77, %p78
      %s81 = sadd.s32 %s80, 1
      %p84 = scmp.eq.s32.totalorder %s25, 1
      %p85 = scmp.ne.s32.totalorder %s80, %s82
      %p86 = scmp.eq.s32.totalorder %s25, 0
      %p87 = por %p85, %p86
      %p88 = scmp.ne.s32.totalorder %s80, %s82
      %p89 = scmp.eq.s32.totalorder %s30, 1
      %p90 = por %p88, %p89
      %p91 = scmp.ne.s32.totalorder %s82, %s83
      %p92 = scmp.eq.s32.totalorder %s30, 0
      %p93 = por %p91, %p92
      %p94 = scmp.ne.s32.totalorder %s82, %s83
      %p95 = scmp.eq.s32.totalorder %s31, 1
      %p96 = por %p94, %p95
      %p98 = scmp.ne.s32.totalorder %s83, %s97
      %p99 = scmp.eq.s32.totalorder %s31, 0
      %p100 = por %p98, %p99
      %s102 = sadd.s32 %s101, 1
      %p105 = scmp.eq.s32.totalorder %s25, 1
      %p106 = scmp.ne.s32.totalorder %s101, %s103
      %p107 = scmp.eq.s32.totalorder %s25, 0
      %p108 = por %p106, %p107
      %p109 = scmp.ne.s32.totalorder %s101, %s103
      %p110 = scmp.eq.s32.totalorder %s30, 1
      %p111 = por %p109, %p110
      %p112 = scmp.ne.s32.totalorder %s103, %s104
      %p113 = scmp.eq.s32.totalorder %s30, 0
      %p114 = por %p112, %p113
      %p115 = scmp.ne.s32.totalorder %s103, %s104
      %p116 = scmp.eq.s32.totalorder %s31, 1
      %p117 = por %p115, %p116
      %p119 = scmp.ne.s32.totalorder %s104, %s118
      %p120 = scmp.eq.s32.totalorder %s31, 0
      %p121 = por %p119, %p120
      %s123 = sadd.s32 %s122, 1
      %p126 = scmp.eq.s32.totalorder %s25, 1
      %p127 = scmp.ne.s32.totalorder %s122, %s124
      %p128 = scmp.eq.s32.totalorder %s25, 0
      %p129 = por %p127, %p128
      %p130 = scmp.ne.s32.totalorder %s122, %s124
      %p131 = scmp.eq.s32.totalorder %s30, 1
      %p132 = por %p130, %p131
      %p133 = scmp.ne.s32.totalorder %s124, %s125
      %p134 = scmp.eq.s32.totalorder %s30, 0
      %p135 = por %p133, %p134
      %p136 = scmp.ne.s32.totalorder %s124, %s125
      %p137 = scmp.eq.s32.totalorder %s31, 1
      %p138 = por %p136, %p137
      %p140 = scmp.ne.s32.totalorder %s125, %s139
      %p141 = scmp.eq.s32.totalorder %s31, 0
      %p142 = por %p140, %p141
      %s144 = sadd.s32 %s143, 1
      %p147 = scmp.eq.s32.totalorder %s25, 1
      %p148 = scmp.ne.s32.totalorder %s143, %s145
      %p149 = scmp.eq.s32.totalorder %s25, 0
      %p150 = por %p148, %p149
      %p151 = scmp.ne.s32.totalorder %s143, %s145
      %p152 = scmp.eq.s32.totalorder %s30, 1
      %p153 = por %p151, %p152
      %p154 = scmp.ne.s32.totalorder %s145, %s146
      %p155 = scmp.eq.s32.totalorder %s30, 0
      %p156 = por %p154, %p155
      %p157 = scmp.ne.s32.totalorder %s145, %s146
      %p158 = scmp.eq.s32.totalorder %s31, 1
      %p159 = por %p157, %p158
      %p161 = scmp.ne.s32.totalorder %s146, %s160
      %p162 = scmp.eq.s32.totalorder %s31, 0
      %p163 = por %p161, %p162
      %s165 = sadd.s32 %s164, 1
      %p168 = scmp.eq.s32.totalorder %s25, 1
      %p169 = scmp.ne.s32.totalorder %s164, %s166
      %p170 = scmp.eq.s32.totalorder %s25, 0
      %p171 = por %p169, %p170
      %p172 = scmp.ne.s32.totalorder %s164, %s166
      %p173 = scmp.eq.s32.totalorder %s30, 1
      %p174 = por %p172, %p173
      %p175 = scmp.ne.s32.totalorder %s166, %s167
      %p176 = scmp.eq.s32.totalorder %s30, 0
      %p177 = por %p175, %p176
      %p178 = scmp.ne.s32.totalorder %s166, %s167
      %p179 = scmp.eq.s32.totalorder %s31, 1
      %p180 = por %p178, %p179
      %p182 = scmp.ne.s32.totalorder %s167, %s181
      %p183 = scmp.eq.s32.totalorder %s31, 0
      %p184 = por %p182, %p183
      %s186 = sadd.s32 %s185, 1
      %p189 = scmp.eq.s32.totalorder %s25, 1
      %p190 = scmp.ne.s32.totalorder %s185, %s187
      %p191 = scmp.eq.s32.totalorder %s25, 0
      %p192 = por %p190, %p191
      %p193 = scmp.ne.s32.totalorder %s185, %s187
      %p194 = scmp.eq.s32.totalorder %s30, 1
      %p195 = por %p193, %p194
      %p196 = scmp.ne.s32.totalorder %s187, %s188
      %p197 = scmp.eq.s32.totalorder %s30, 0
      %p198 = por %p196, %p197
      %p199 = scmp.ne.s32.totalorder %s187, %s188
      %p200 = scmp.eq.s32.totalorder %s31, 1
      %p201 = por %p199, %p200
      %p203 = scmp.ne.s32.totalorder %s188, %s202
      %p204 = scmp.eq.s32.totalorder %s31, 0
      %p205 = por %p203, %p204
      %s207 = sadd.s32 %s206, 1
      %p210 = scmp.eq.s32.totalorder %s25, 1
      %p211 = scmp.ne.s32.totalorder %s206, %s208
      %p212 = scmp.eq.s32.totalorder %s25, 0
      %p213 = por %p211, %p212
      %p214 = scmp.ne.s32.totalorder %s206, %s208
      %p215 = scmp.eq.s32.totalorder %s30, 1
      %p216 = por %p214, %p215
      %p217 = scmp.ne.s32.totalorder %s208, %s209
      %p218 = scmp.eq.s32.totalorder %s30, 0
      %p219 = por %p217, %p218
      %p220 = scmp.ne.s32.totalorder %s208, %s209
      %p221 = scmp.eq.s32.totalorder %s31, 1
      %p222 = por %p220, %p221
      %p224 = scmp.ne.s32.totalorder %s209, %s223
      %p225 = scmp.eq.s32.totalorder %s31, 0
      %p226 = por %p224, %p225
      %s228 = sadd.s32 %s227, 1
      %p231 = scmp.eq.s32.totalorder %s25, 1
      %p232 = scmp.ne.s32.totalorder %s227, %s229
      %p233 = scmp.eq.s32.totalorder %s25, 0
      %p234 = por %p232, %p233
      %p235 = scmp.ne.s32.totalorder %s227, %s229
      %p236 = scmp.eq.s32.totalorder %s30, 1
      %p237 = por %p235, %p236
      %p238 = scmp.ne.s32.totalorder %s229, %s230
      %p239 = scmp.eq.s32.totalorder %s30, 0
      %p240 = por %p238, %p239
      %p241 = scmp.ne.s32.totalorder %s229, %s230
      %p242 = scmp.eq.s32.totalorder %s31, 1
      %p243 = por %p241, %p242
      %p245 = scmp.ne.s32.totalorder %s230, %s244
      %p246 = scmp.eq.s32.totalorder %s31, 0
      %p247 = por %p245, %p246
      %s249 = sadd.s32 %s248, 1
      %p252 = scmp.eq.s32.totalorder %s25, 1
      %p253 = scmp.ne.s32.totalorder %s248, %s250
      %p254 = scmp.eq.s32.totalorder %s25, 0
      %p255 = por %p253, %p254
      %p256 = scmp.ne.s32.totalorder %s248, %s250
      %p257 = scmp.eq.s32.totalorder %s30, 1
      %p258 = por %p256, %p257
      %p259 = scmp.ne.s32.totalorder %s250, %s251
      %p260 = scmp.eq.s32.totalorder %s30, 0
      %p261 = por %p259, %p260
      %p262 = scmp.ne.s32.totalorder %s250, %s251
      %p263 = scmp.eq.s32.totalorder %s31, 1
      %p264 = por %p262, %p263
      %p266 = scmp.ne.s32.totalorder %s251, %s265
      %p267 = scmp.eq.s32.totalorder %s31, 0
      %p268 = por %p266, %p267
      %s270 = sadd.s32 %s269, 1
      %p273 = scmp.eq.s32.totalorder %s25, 1
      %p274 = scmp.ne.s32.totalorder %s269, %s271
      %p275 = scmp.eq.s32.totalorder %s25, 0
      %p276 = por %p274, %p275
      %p277 = scmp.ne.s32.totalorder %s269, %s271
      %p278 = scmp.eq.s32.totalorder %s30, 1
      %p279 = por %p277, %p278
      %p280 = scmp.ne.s32.totalorder %s271, %s272
      %p281 = scmp.eq.s32.totalorder %s30, 0
      %p282 = por %p280, %p281
      %p283 = scmp.ne.s32.totalorder %s271, %s272
      %p284 = scmp.eq.s32.totalorder %s31, 1
      %p285 = por %p283, %p284
      %p287 = scmp.ne.s32.totalorder %s272, %s286
      %p288 = scmp.eq.s32.totalorder %s31, 0
      %p289 = por %p287, %p288
      %s291 = sadd.s32 %s290, 1
      %p294 = scmp.eq.s32.totalorder %s25, 1
      %p295 = scmp.ne.s32.totalorder %s290, %s292
      %p296 = scmp.eq.s32.totalorder %s25, 0
      %p297 = por %p295, %p296
      %p298 = scmp.ne.s32.totalorder %s290, %s292
      %p299 = scmp.eq.s32.totalorder %s30, 1
      %p300 = por %p298, %p299
      %p301 = scmp.ne.s32.totalorder %s292, %s293
      %p302 = scmp.eq.s32.totalorder %s30, 0
      %p303 = por %p301, %p302
      %p304 = scmp.ne.s32.totalorder %s292, %s293
      %p305 = scmp.eq.s32.totalorder %s31, 1
      %p306 = por %p304, %p305
      %p308 = scmp.ne.s32.totalorder %s293, %s307
      %p309 = scmp.eq.s32.totalorder %s31, 0
      %p310 = por %p308, %p309
      %s312 = sadd.s32 %s311, 1
      %p315 = scmp.eq.s32.totalorder %s25, 1
      %p316 = scmp.ne.s32.totalorder %s311, %s313
      %p317 = scmp.eq.s32.totalorder %s25, 0
      %p318 = por %p316, %p317
      %p319 = scmp.ne.s32.totalorder %s311, %s313
      %p320 = scmp.eq.s32.totalorder %s30, 1
      %p321 = por %p319, %p320
      %p322 = scmp.ne.s32.totalorder %s313, %s314
      %p323 = scmp.eq.s32.totalorder %s30, 0
      %p324 = por %p322, %p323
      %p325 = scmp.ne.s32.totalorder %s313, %s314
      %p326 = scmp.eq.s32.totalorder %s31, 1
      %p327 = por %p325, %p326
      %p329 = scmp.ne.s32.totalorder %s314, %s328
      %p330 = scmp.eq.s32.totalorder %s31, 0
      %p331 = por %p329, %p330
      %s333 = sadd.s32 %s332, 1
      %p336 = scmp.eq.s32.totalorder %s25, 1
      %p337 = scmp.ne.s32.totalorder %s332, %s334
      %p338 = scmp.eq.s32.totalorder %s25, 0
      %p339 = por %p337, %p338
      %p340 = scmp.ne.s32.totalorder %s332, %s334
      %p341 = scmp.eq.s32.totalorder %s30, 1
      %p342 = por %p340, %p341
      %p343 = scmp.ne.s32.totalorder %s334, %s335
      %p344 = scmp.eq.s32.totalorder %s30, 0
      %p345 = por %p343, %p344
      %p346 = scmp.ne.s32.totalorder %s334, %s335
      %p347 = scmp.eq.s32.totalorder %s31, 1
      %p348 = por %p346, %p347
      %p350 = scmp.ne.s32.totalorder %s335, %s349
      %p351 = scmp.eq.s32.totalorder %s31, 0
      %p352 = por %p350, %p351
      %s354 = sadd.s32 %s353, 1
      %p357 = scmp.eq.s32.totalorder %s25, 1
      %p358 = scmp.ne.s32.totalorder %s353, %s355
      %p359 = scmp.eq.s32.totalorder %s25, 0
      %p360 = por %p358, %p359
      %p361 = scmp.ne.s32.totalorder %s353, %s355
      %p362 = scmp.eq.s32.totalorder %s30, 1
      %p363 = por %p361, %p362
      %p364 = scmp.ne.s32.totalorder %s355, %s356
      %p365 = scmp.eq.s32.totalorder %s30, 0
      %p366 = por %p364, %p365
      %p367 = scmp.ne.s32.totalorder %s355, %s356
      %p368 = scmp.eq.s32.totalorder %s31, 1
      %p369 = por %p367, %p368
      %p371 = scmp.ne.s32.totalorder %s356, %s370
      %p372 = scmp.eq.s32.totalorder %s31, 0
      %p373 = por %p371, %p372
      %s375 = sadd.s32 %s374, 1
      %p378 = scmp.eq.s32.totalorder %s25, 1
      %p379 = scmp.ne.s32.totalorder %s374, %s376
      %p380 = scmp.eq.s32.totalorder %s25, 0
      %p381 = por %p379, %p380
      %p382 = scmp.ne.s32.totalorder %s374, %s376
      %p383 = scmp.eq.s32.totalorder %s30, 1
      %p384 = por %p382, %p383
      %p385 = scmp.ne.s32.totalorder %s376, %s377
      %p386 = scmp.eq.s32.totalorder %s30, 0
      %p387 = por %p385, %p386
      %p388 = scmp.ne.s32.totalorder %s376, %s377
      %p389 = scmp.eq.s32.totalorder %s31, 1
      %p390 = por %p388, %p389
      %p392 = scmp.ne.s32.totalorder %s377, %s391
      %p393 = scmp.eq.s32.totalorder %s31, 0
      %p394 = por %p392, %p393
      %s395 = ssub.s32 %s25, %s32
      %p396 = scmp.eq.s32.totalorder %s395, 0
      %s398 = sadd.s32 %s397, 1
      %s399 = scalar_select %p396, %s397, %s398
      %p402 = pneg %p396
      %p403 = scmp.eq.s32.totalorder %s25, 1
      %p404 = por %p402, %p403
      %p405 = scmp.ne.s32.totalorder %s397, %s400
      %p406 = scmp.eq.s32.totalorder %s25, 0
      %p407 = por %p405, %p406
      %p408 = scmp.ne.s32.totalorder %s397, %s400
      %p409 = scmp.eq.s32.totalorder %s30, 1
      %p410 = por %p408, %p409
      %p411 = scmp.ne.s32.totalorder %s400, %s401
      %p412 = scmp.eq.s32.totalorder %s30, 0
      %p413 = por %p411, %p412
      %p414 = scmp.ne.s32.totalorder %s400, %s401
      %p415 = scmp.eq.s32.totalorder %s31, 1
      %p416 = por %p414, %p415
      %p418 = scmp.ne.s32.totalorder %s401, %s417
      %p419 = scmp.eq.s32.totalorder %s31, 0
      %p420 = por %p418, %p419
      %p421 = scmp.le.s32.totalorder 1, %s25
      %p422 = scmp.lt.s32.totalorder %s25, 3
      %p423 = pnand %p421, %p422
      %p424 = pneg %p423
      // Predicated region
      $region9: #{admm_resnet_forward.1} parent=5 // pred_check
        _
      $region10: #{admm_resnet_forward.1} parent=5 // pred_check_branch
        %426 = sbr.rel (%p423) target = $region12
      $region11: #{admm_resnet_forward.1} parent=5 // pred_region
        %s427 = ssub.s32 %s25, 1
        // Predicated region
        $region13: #{admm_resnet_forward.1} parent=11 // pred_check
          %p428 = pneg %p72
        $region14: #{admm_resnet_forward.1} parent=11 // pred_check_branch
          %430 = sbr.rel (%p428) target = $region16
        $region15: #{admm_resnet_forward.1} parent=11 // pred_region
          _
        $region16: #{admm_resnet_forward.1} parent=11 // pred_fallthru
          _
        // Predicated region
        $region17: #{admm_resnet_forward.1} parent=11 // pred_check
          %p431 = pneg %p93
        $region18: #{admm_resnet_forward.1} parent=11 // pred_check_branch
          %433 = sbr.rel (%p431) target = $region20
        $region19: #{admm_resnet_forward.1} parent=11 // pred_region
          _
        $region20: #{admm_resnet_forward.1} parent=11 // pred_fallthru
          _
        // Predicated region
        $region21: #{admm_resnet_forward.1} parent=11 // pred_check
          %p434 = pneg %p114
        $region22: #{admm_resnet_forward.1} parent=11 // pred_check_branch
          %436 = sbr.rel (%p434) target = $region24
        $region23: #{admm_resnet_forward.1} parent=11 // pred_region
          _
        $region24: #{admm_resnet_forward.1} parent=11 // pred_fallthru
          _
        // Predicated region
        $region25: #{admm_resnet_forward.1} parent=11 // pred_check
          %p437 = pneg %p135
        $region26: #{admm_resnet_forward.1} parent=11 // pred_check_branch
          %439 = sbr.rel (%p437) target = $region28
        $region27: #{admm_resnet_forward.1} parent=11 // pred_region
          _
        $region28: #{admm_resnet_forward.1} parent=11 // pred_fallthru
          _
        // Predicated region
        $region29: #{admm_resnet_forward.1} parent=11 // pred_check
          %p440 = pneg %p156
        $region30: #{admm_resnet_forward.1} parent=11 // pred_check_branch
          %442 = sbr.rel (%p440) target = $region32
        $region31: #{admm_resnet_forward.1} parent=11 // pred_region
          _
        $region32: #{admm_resnet_forward.1} parent=11 // pred_fallthru
          _
        // Predicated region
        $region33: #{admm_resnet_forward.1} parent=11 // pred_check
          %p443 = pneg %p177
        $region34: #{admm_resnet_forward.1} parent=11 // pred_check_branch
          %445 = sbr.rel (%p443) target = $region36
        $region35: #{admm_resnet_forward.1} parent=11 // pred_region
          _
        $region36: #{admm_resnet_forward.1} parent=11 // pred_fallthru
          _
        // Predicated region
        $region37: #{admm_resnet_forward.1} parent=11 // pred_check
          %p446 = pneg %p198
        $region38: #{admm_resnet_forward.1} parent=11 // pred_check_branch
          %448 = sbr.rel (%p446) target = $region40
        $region39: #{admm_resnet_forward.1} parent=11 // pred_region
          _
        $region40: #{admm_resnet_forward.1} parent=11 // pred_fallthru
          _
        // Predicated region
        $region41: #{admm_resnet_forward.1} parent=11 // pred_check
          %p449 = pneg %p219
        $region42: #{admm_resnet_forward.1} parent=11 // pred_check_branch
          %451 = sbr.rel (%p449) target = $region44
        $region43: #{admm_resnet_forward.1} parent=11 // pred_region
          _
        $region44: #{admm_resnet_forward.1} parent=11 // pred_fallthru
          _
        // Predicated region
        $region45: #{admm_resnet_forward.1} parent=11 // pred_check
          %p452 = pneg %p240
        $region46: #{admm_resnet_forward.1} parent=11 // pred_check_branch
          %454 = sbr.rel (%p452) target = $region48
        $region47: #{admm_resnet_forward.1} parent=11 // pred_region
          _
        $region48: #{admm_resnet_forward.1} parent=11 // pred_fallthru
          _
        // Predicated region
        $region49: #{admm_resnet_forward.1} parent=11 // pred_check
          %p455 = pneg %p261
        $region50: #{admm_resnet_forward.1} parent=11 // pred_check_branch
          %457 = sbr.rel (%p455) target = $region52
        $region51: #{admm_resnet_forward.1} parent=11 // pred_region
          _
        $region52: #{admm_resnet_forward.1} parent=11 // pred_fallthru
          _
        // Predicated region
        $region53: #{admm_resnet_forward.1} parent=11 // pred_check
          %p458 = pneg %p282
        $region54: #{admm_resnet_forward.1} parent=11 // pred_check_branch
          %460 = sbr.rel (%p458) target = $region56
        $region55: #{admm_resnet_forward.1} parent=11 // pred_region
          _
        $region56: #{admm_resnet_forward.1} parent=11 // pred_fallthru
          _
        // Predicated region
        $region57: #{admm_resnet_forward.1} parent=11 // pred_check
          %p461 = pneg %p303
        $region58: #{admm_resnet_forward.1} parent=11 // pred_check_branch
          %463 = sbr.rel (%p461) target = $region60
        $region59: #{admm_resnet_forward.1} parent=11 // pred_region
          _
        $region60: #{admm_resnet_forward.1} parent=11 // pred_fallthru
          _
        // Predicated region
        $region61: #{admm_resnet_forward.1} parent=11 // pred_check
          %p464 = pneg %p324
        $region62: #{admm_resnet_forward.1} parent=11 // pred_check_branch
          %466 = sbr.rel (%p464) target = $region64
        $region63: #{admm_resnet_forward.1} parent=11 // pred_region
          _
        $region64: #{admm_resnet_forward.1} parent=11 // pred_fallthru
          _
        // Predicated region
        $region65: #{admm_resnet_forward.1} parent=11 // pred_check
          %p467 = pneg %p345
        $region66: #{admm_resnet_forward.1} parent=11 // pred_check_branch
          %469 = sbr.rel (%p467) target = $region68
        $region67: #{admm_resnet_forward.1} parent=11 // pred_region
          _
        $region68: #{admm_resnet_forward.1} parent=11 // pred_fallthru
          _
        // Predicated region
        $region69: #{admm_resnet_forward.1} parent=11 // pred_check
          %p470 = pneg %p366
        $region70: #{admm_resnet_forward.1} parent=11 // pred_check_branch
          %472 = sbr.rel (%p470) target = $region72
        $region71: #{admm_resnet_forward.1} parent=11 // pred_region
          %474 = vsyncadd [#allocation3], 0
          %s476 = sshll.u32 %s15, 4
          %s477 = int_to_ptr.vmem [resolvable:$true] %s476
          %479 = dma.vmem_to_smem %s477, 16, [#allocation2], [#allocation3]
        $region72: #{admm_resnet_forward.1} parent=11 // pred_fallthru
          _
        // Predicated region
        $region73: #{admm_resnet_forward.1} parent=11 // pred_check
          %p480 = pneg %p387
        $region74: #{admm_resnet_forward.1} parent=11 // pred_check_branch
          %482 = sbr.rel (%p480) target = $region76
        $region75: #{admm_resnet_forward.1} parent=11 // pred_region
          %484 = vsyncadd [#allocation5], 0
          %s486 = sshll.u32 %s16, 4
          %s487 = int_to_ptr.vmem [resolvable:$true] %s486
          %489 = dma.vmem_to_smem %s487, 16, [#allocation4], [#allocation5]
        $region76: #{admm_resnet_forward.1} parent=11 // pred_fallthru
          _
      $region12: #{admm_resnet_forward.1} parent=5 // pred_fallthru
        _
      %p490 = scmp.lt.s32.totalorder %s25, 2
      // Predicated region
      $region77: #{admm_resnet_forward.1} parent=5 // pred_check
        %p491 = pneg %p490
      $region78: #{admm_resnet_forward.1} parent=5 // pred_check_branch
        %493 = sbr.rel (%p491) target = $region80
      $region79: #{admm_resnet_forward.1} parent=5 // pred_region
        // Predicated region
        $region81: #{admm_resnet_forward.1} parent=79 // pred_check
          %p494 = pneg %p45
        $region82: #{admm_resnet_forward.1} parent=79 // pred_check_branch
          %496 = sbr.rel (%p494) target = $region84
        $region83: #{admm_resnet_forward.1} parent=79 // pred_region
          %p497 = scmp.lt.s32.totalorder %s25, 1
          %s498 = scalar_select %p497, %s25, 1
          %s499 = smul.addr %s498, 2
          %s500 = smul.addr %s499, 4
          %s501 = scalar_lea.vmem %s0, %s500
        $region84: #{admm_resnet_forward.1} parent=79 // pred_fallthru
          _
      $region80: #{admm_resnet_forward.1} parent=5 // pred_fallthru
        _
      %p502 = scmp.le.s32.totalorder 1, %s25
      %p503 = scmp.lt.s32.totalorder %s25, 3
      %p504 = pnand %p502, %p503
      %p505 = pneg %p504
      // Predicated region
      $region85: #{admm_resnet_forward.1} parent=5 // pred_check
        _
      $region86: #{admm_resnet_forward.1} parent=5 // pred_check_branch
        %507 = sbr.rel (%p504) target = $region88
      $region87: #{admm_resnet_forward.1} parent=5 // pred_region
        %s508 = ssub.s32 %s25, 1
        // Predicated region
        $region89: #{admm_resnet_forward.1} parent=87 // pred_check
          %p509 = pneg %p366
        $region90: #{admm_resnet_forward.1} parent=87 // pred_check_branch
          %511 = sbr.rel (%p509) target = $region92
        $region91: #{admm_resnet_forward.1} parent=87 // pred_region
          %513 = dma.done [#allocation3], 16
        $region92: #{admm_resnet_forward.1} parent=87 // pred_fallthru
          _
        // Predicated region
        $region93: #{admm_resnet_forward.1} parent=87 // pred_check
          %p514 = pneg %p387
        $region94: #{admm_resnet_forward.1} parent=87 // pred_check_branch
          %516 = sbr.rel (%p514) target = $region96
        $region95: #{admm_resnet_forward.1} parent=87 // pred_region
          %518 = dma.done [#allocation5], 16
        $region96: #{admm_resnet_forward.1} parent=87 // pred_fallthru
          _
        %519 = sfence
        %p520 = scmp.lt.s32.totalorder %s30, 1
        %s521 = scalar_select %p520, %s30, 1
        %s522 = smul.addr %s521, 2
        %s523 = smul.addr %s522, 4
        %s524 = scalar_lea.vmem %s0, %s523
        %p525 = pneg %p51
        %p526 = pneg %p48
        %p527 = pneg %p72
        %p528 = pneg %p69
        %p529 = pneg %p93
        %p530 = pneg %p90
        %p531 = pneg %p114
        %p532 = pneg %p111
        %p533 = pneg %p135
        %p534 = pneg %p132
        %p535 = pneg %p156
        %p536 = pneg %p153
        %p537 = pneg %p177
        %p538 = pneg %p174
        %p539 = pneg %p198
        %p540 = pneg %p195
        %p541 = pneg %p219
        %p542 = pneg %p216
        %p543 = pneg %p240
        %p544 = pneg %p237
        %p545 = pneg %p261
        %p546 = pneg %p258
        %p547 = pneg %p282
        %p548 = pneg %p279
        %p549 = pneg %p303
        %p550 = pneg %p300
        %p551 = pneg %p324
        %p552 = pneg %p321
        %p553 = pneg %p345
        %p554 = pneg %p342
        %p555 = pneg %p366
        %p556 = pneg %p363
        %p557 = pneg %p387
        %p558 = pneg %p384
        %p559 = pneg %p413
        %p560 = pneg %p410
        %p561 = scmp.lt.s32.totalorder %s30, 1
        %s562 = scalar_select %p561, %s30, 1
        %s563 = smul.addr %s562, 2
        %s564 = smul.addr %s563, 4
        %s565 = scalar_lea.vmem %s17, %s564
        %p566 = scmp.lt.s32.totalorder %s30, 1
        %s567 = scalar_select %p566, %s30, 1
        %s568 = smul.addr %s567, 2
        %s569 = smul.addr %s568, 4
        %s570 = scalar_lea.vmem %s0, %s569
        %p571 = scmp.lt.s32.totalorder %s30, 1
        %s572 = scalar_select %p571, %s30, 1
        %s573 = smul.addr %s572, 2
        %s574 = smul.addr %s573, 4
        %s575 = scalar_lea.vmem %s17, %s574
        %v576 = vld [vmem:[%s570] sm:$0xff]
        %v577 = vld [vmem:[%s1] sm:$0xff]
        %v578 = vld [vmem:[%s2] sm:$0xf]
        %v579 = vld [vmem:[%s3] sm:$0xf]
        %581 = vst [vmem:[#allocation1] ss:$2 sm:$0xff] %v576
        %v582 = vld.sshfl [vmem:[#allocation1] sm:$0xff pattern:$0x75316420]
        %v583 = vld.sshfl [vmem:[#allocation1 + $0x8] sm:$0xff pattern:$0x75316420]
        %vm584 = vcmask 31744
        %v586 = vsel %vm584, %v577, 0
        %vm588 = vcmask 1043456
        %v589 = vsel %vm588, %v582, 0
        %v591 = vsel %vm588, %v583, 0
        %593 = vmatpush.msra.mxu0 0.0
        %594 = vmatpush.msra.mxu0 0.0
        %595 = vmatpush.msra.mxu0 0.0
        %596 = vmatpush.msra.mxu0 0.0
        %597 = vmatpush.msra.mxu0 0.0
        %598 = vmatpush.msra.mxu0 0.0
        %599 = vmatpush.msra.mxu0 0.0
        %600 = vmatpush.msra.mxu0 0.0
        %601 = vmatpush.msra.mxu0 0.0
        %602 = vmatpush.msra.mxu0 0.0
        %603 = vmatpush.msra.mxu0 0.0
        %604 = vmatpush.msra.mxu0 0.0
        %605 = vmatpush.msra.mxu0 0.0
        %606 = vmatpush.msra.mxu0 0.0
        %607 = vmatpush.msra.mxu0 0.0
        %608 = vmatpush.msra.mxu0 %v589
        %609 = vmatmul.f32.gmra.mxu0 %v586
        %v610 = vpop.f32.mrf.mxu0
        %v611 = vadd.f32 0.0, %v610
        %612 = vdwg.mxu0
        %613 = vmatpush.msra.mxu0 0.0
        %614 = vmatpush.msra.mxu0 0.0
        %615 = vmatpush.msra.mxu0 0.0
        %616 = vmatpush.msra.mxu0 0.0
        %617 = vmatpush.msra.mxu0 0.0
        %618 = vmatpush.msra.mxu0 0.0
        %619 = vmatpush.msra.mxu0 0.0
        %620 = vmatpush.msra.mxu0 0.0
        %621 = vmatpush.msra.mxu0 0.0
        %622 = vmatpush.msra.mxu0 0.0
        %623 = vmatpush.msra.mxu0 0.0
        %624 = vmatpush.msra.mxu0 0.0
        %625 = vmatpush.msra.mxu0 0.0
        %626 = vmatpush.msra.mxu0 0.0
        %627 = vmatpush.msra.mxu0 0.0
        %628 = vmatpush.msra.mxu0 %v591
        %629 = vmatmul.f32.gmra.mxu0 %v586
        %v630 = vpop.f32.mrf.mxu0
        %v631 = vadd.f32 0.0, %v630
        %632 = vdwg.mxu0
        %vm633 = vcmask 64512
        %v635 = vsel %vm633, %v578, 0
        %637 = vmatpush.msra.mxu0 0.0
        %638 = vmatpush.msra.mxu0 0.0
        %639 = vmatpush.msra.mxu0 0.0
        %640 = vmatpush.msra.mxu0 0.0
        %641 = vmatpush.msra.mxu0 0.0
        %642 = vmatpush.msra.mxu0 0.0
        %643 = vmatpush.msra.mxu0 0.0
        %644 = vmatpush.msra.mxu0 0.0
        %645 = vmatpush.msra.mxu0 0.0
        %646 = vmatpush.msra.mxu0 0.0
        %647 = vmatpush.msra.mxu0 0.0
        %648 = vmatpush.msra.mxu0 0.0
        %649 = vmatpush.msra.mxu0 0.0
        %650 = vmatpush.msra.mxu0 0.0
        %651 = vmatpush.msra.mxu0 0.0
        %652 = vmatpush.msra.mxu0 %v611
        %653 = vmatmul.f32.gmra.mxu0 %v635
        %v654 = vpop.f32.mrf.mxu0
        %v655 = vadd.f32 0.0, %v654
        %656 = vdwg.mxu0
        %657 = vmatpush.msra.mxu0 0.0
        %658 = vmatpush.msra.mxu0 0.0
        %659 = vmatpush.msra.mxu0 0.0
        %660 = vmatpush.msra.mxu0 0.0
        %661 = vmatpush.msra.mxu0 0.0
        %662 = vmatpush.msra.mxu0 0.0
        %663 = vmatpush.msra.mxu0 0.0
        %664 = vmatpush.msra.mxu0 0.0
        %665 = vmatpush.msra.mxu0 0.0
        %666 = vmatpush.msra.mxu0 0.0
        %667 = vmatpush.msra.mxu0 0.0
        %668 = vmatpush.msra.mxu0 0.0
        %669 = vmatpush.msra.mxu0 0.0
        %670 = vmatpush.msra.mxu0 0.0
        %671 = vmatpush.msra.mxu0 0.0
        %672 = vmatpush.msra.mxu0 %v631
        %673 = vmatmul.f32.gmra.mxu0 %v635
        %v674 = vpop.f32.mrf.mxu0
        %v675 = vadd.f32 0.0, %v674
        %676 = vdwg.mxu0
        %s677 = sld [smem:[#allocation4]]
        %s678 = sld [smem:[#allocation2]]
        %v679 = vadd.f32 %v655, 0.0
        %v680 = vadd.f32 %v675, 0.0
        %s681 = ssub.f32 0.0, %s677
        %v682 = vstv %s681
        %v683 = vmax.f32 %v682, %v679
        %v684 = vmax.f32 %v682, %v680
        %v685 = vstv %s677
        %v686 = vmin.f32 %v685, %v683
        %v687 = vmin.f32 %v685, %v684
        %v688 = vsub.f32 %v679, %v686
        %v689 = vsub.f32 %v680, %v687
        %v691 = vsel %vm584, %v579, 0
        %v694 = vsel %vm588, %v655, 0
        %v697 = vsel %vm588, %v675, 0
        %699 = vmatpush.msra.mxu0 0.0
        %700 = vmatpush.msra.mxu0 0.0
        %701 = vmatpush.msra.mxu0 0.0
        %702 = vmatpush.msra.mxu0 0.0
        %703 = vmatpush.msra.mxu0 0.0
        %704 = vmatpush.msra.mxu0 0.0
        %705 = vmatpush.msra.mxu0 0.0
        %706 = vmatpush.msra.mxu0 0.0
        %707 = vmatpush.msra.mxu0 0.0
        %708 = vmatpush.msra.mxu0 0.0
        %709 = vmatpush.msra.mxu0 0.0
        %710 = vmatpush.msra.mxu0 0.0
        %711 = vmatpush.msra.mxu0 0.0
        %712 = vmatpush.msra.mxu0 0.0
        %713 = vmatpush.msra.mxu0 0.0
        %714 = vmatpush.msra.mxu0 %v694
        %715 = vmatmul.f32.gmra.mxu0 %v691
        %v716 = vpop.f32.mrf.mxu0
        %v717 = vadd.f32 0.0, %v716
        %718 = vdwg.mxu0
        %719 = vmatpush.msra.mxu0 0.0
        %720 = vmatpush.msra.mxu0 0.0
        %721 = vmatpush.msra.mxu0 0.0
        %722 = vmatpush.msra.mxu0 0.0
        %723 = vmatpush.msra.mxu0 0.0
        %724 = vmatpush.msra.mxu0 0.0
        %725 = vmatpush.msra.mxu0 0.0
        %726 = vmatpush.msra.mxu0 0.0
        %727 = vmatpush.msra.mxu0 0.0
        %728 = vmatpush.msra.mxu0 0.0
        %729 = vmatpush.msra.mxu0 0.0
        %730 = vmatpush.msra.mxu0 0.0
        %731 = vmatpush.msra.mxu0 0.0
        %732 = vmatpush.msra.mxu0 0.0
        %733 = vmatpush.msra.mxu0 0.0
        %734 = vmatpush.msra.mxu0 %v697
        %735 = vmatmul.f32.gmra.mxu0 %v691
        %v736 = vpop.f32.mrf.mxu0
        %v737 = vadd.f32 0.0, %v736
        %738 = vdwg.mxu0
        %v739 = vsub.f32 %v717, %v655
        %v740 = vsub.f32 %v737, %v675
        %v741 = vstv %s678
        %v742 = vmul.f32 %v741, %v739
        %v743 = vmul.f32 %v741, %v740
        %v744 = vsub.f32 %v688, %v742
        %v745 = vsub.f32 %v689, %v743
        %v746 = vadd.f32 %v744, 0.0
        %v747 = vadd.f32 %v745, 0.0
        %v748 = vsub.f32 %v746, %v688
        %v749 = vsub.f32 %v747, %v689
        %s750 = sld [smem:[#allocation4 + $0x1]]
        %s751 = sld [smem:[#allocation2 + $0x1]]
        %v752 = vadd.f32 %v744, %v748
        %v753 = vadd.f32 %v745, %v749
        %s754 = ssub.f32 0.0, %s750
        %v755 = vstv %s754
        %v756 = vmax.f32 %v755, %v752
        %v757 = vmax.f32 %v755, %v753
        %v758 = vstv %s750
        %v759 = vmin.f32 %v758, %v756
        %v760 = vmin.f32 %v758, %v757
        %v761 = vsub.f32 %v752, %v759
        %v762 = vsub.f32 %v753, %v760
        %v764 = vsel %vm588, %v744, 0
        %v767 = vsel %vm588, %v745, 0
        %769 = vmatpush.msra.mxu0 0.0
        %770 = vmatpush.msra.mxu0 0.0
        %771 = vmatpush.msra.mxu0 0.0
        %772 = vmatpush.msra.mxu0 0.0
        %773 = vmatpush.msra.mxu0 0.0
        %774 = vmatpush.msra.mxu0 0.0
        %775 = vmatpush.msra.mxu0 0.0
        %776 = vmatpush.msra.mxu0 0.0
        %777 = vmatpush.msra.mxu0 0.0
        %778 = vmatpush.msra.mxu0 0.0
        %779 = vmatpush.msra.mxu0 0.0
        %780 = vmatpush.msra.mxu0 0.0
        %781 = vmatpush.msra.mxu0 0.0
        %782 = vmatpush.msra.mxu0 0.0
        %783 = vmatpush.msra.mxu0 0.0
        %784 = vmatpush.msra.mxu0 %v764
        %785 = vmatmul.f32.gmra.mxu0 %v691
        %v786 = vpop.f32.mrf.mxu0
        %v787 = vadd.f32 0.0, %v786
        %788 = vdwg.mxu0
        %789 = vmatpush.msra.mxu0 0.0
        %790 = vmatpush.msra.mxu0 0.0
        %791 = vmatpush.msra.mxu0 0.0
        %792 = vmatpush.msra.mxu0 0.0
        %793 = vmatpush.msra.mxu0 0.0
        %794 = vmatpush.msra.mxu0 0.0
        %795 = vmatpush.msra.mxu0 0.0
        %796 = vmatpush.msra.mxu0 0.0
        %797 = vmatpush.msra.mxu0 0.0
        %798 = vmatpush.msra.mxu0 0.0
        %799 = vmatpush.msra.mxu0 0.0
        %800 = vmatpush.msra.mxu0 0.0
        %801 = vmatpush.msra.mxu0 0.0
        %802 = vmatpush.msra.mxu0 0.0
        %803 = vmatpush.msra.mxu0 0.0
        %804 = vmatpush.msra.mxu0 %v767
        %805 = vmatmul.f32.gmra.mxu0 %v691
        %v806 = vpop.f32.mrf.mxu0
        %v807 = vadd.f32 0.0, %v806
        %808 = vdwg.mxu0
        %v809 = vsub.f32 %v787, %v655
        %v810 = vsub.f32 %v807, %v675
        %v811 = vstv %s751
        %v812 = vmul.f32 %v811, %v809
        %v813 = vmul.f32 %v811, %v810
        %v814 = vsub.f32 %v761, %v812
        %v815 = vsub.f32 %v762, %v813
        %v816 = vadd.f32 %v748, %v814
        %v817 = vadd.f32 %v749, %v815
        %v818 = vsub.f32 %v816, %v761
        %v819 = vsub.f32 %v817, %v762
        %s820 = sld [smem:[#allocation4 + $0x2]]
        %s821 = sld [smem:[#allocation2 + $0x2]]
        %v822 = vadd.f32 %v814, %v818
        %v823 = vadd.f32 %v815, %v819
        %s824 = ssub.f32 0.0, %s820
        %v825 = vstv %s824
        %v826 = vmax.f32 %v825, %v822
        %v827 = vmax.f32 %v825, %v823
        %v828 = vstv %s820
        %v829 = vmin.f32 %v828, %v826
        %v830 = vmin.f32 %v828, %v827
        %v831 = vsub.f32 %v822, %v829
        %v832 = vsub.f32 %v823, %v830
        %v834 = vsel %vm588, %v814, 0
        %v837 = vsel %vm588, %v815, 0
        %839 = vmatpush.msra.mxu0 0.0
        %840 = vmatpush.msra.mxu0 0.0
        %841 = vmatpush.msra.mxu0 0.0
        %842 = vmatpush.msra.mxu0 0.0
        %843 = vmatpush.msra.mxu0 0.0
        %844 = vmatpush.msra.mxu0 0.0
        %845 = vmatpush.msra.mxu0 0.0
        %846 = vmatpush.msra.mxu0 0.0
        %847 = vmatpush.msra.mxu0 0.0
        %848 = vmatpush.msra.mxu0 0.0
        %849 = vmatpush.msra.mxu0 0.0
        %850 = vmatpush.msra.mxu0 0.0
        %851 = vmatpush.msra.mxu0 0.0
        %852 = vmatpush.msra.mxu0 0.0
        %853 = vmatpush.msra.mxu0 0.0
        %854 = vmatpush.msra.mxu0 %v834
        %855 = vmatmul.f32.gmra.mxu0 %v691
        %v856 = vpop.f32.mrf.mxu0
        %v857 = vadd.f32 0.0, %v856
        %858 = vdwg.mxu0
        %859 = vmatpush.msra.mxu0 0.0
        %860 = vmatpush.msra.mxu0 0.0
        %861 = vmatpush.msra.mxu0 0.0
        %862 = vmatpush.msra.mxu0 0.0
        %863 = vmatpush.msra.mxu0 0.0
        %864 = vmatpush.msra.mxu0 0.0
        %865 = vmatpush.msra.mxu0 0.0
        %866 = vmatpush.msra.mxu0 0.0
        %867 = vmatpush.msra.mxu0 0.0
        %868 = vmatpush.msra.mxu0 0.0
        %869 = vmatpush.msra.mxu0 0.0
        %870 = vmatpush.msra.mxu0 0.0
        %871 = vmatpush.msra.mxu0 0.0
        %872 = vmatpush.msra.mxu0 0.0
        %873 = vmatpush.msra.mxu0 0.0
        %874 = vmatpush.msra.mxu0 %v837
        %875 = vmatmul.f32.gmra.mxu0 %v691
        %v876 = vpop.f32.mrf.mxu0
        %v877 = vadd.f32 0.0, %v876
        %878 = vdwg.mxu0
        %v879 = vsub.f32 %v857, %v655
        %v880 = vsub.f32 %v877, %v675
        %v881 = vstv %s821
        %v882 = vmul.f32 %v881, %v879
        %v883 = vmul.f32 %v881, %v880
        %v884 = vsub.f32 %v831, %v882
        %v885 = vsub.f32 %v832, %v883
        %v886 = vld [vmem:[%s4] sm:$0xff]
        %v887 = vld [vmem:[%s5] sm:$0xff]
        %889 = vset.pattern.permute.xlu0 0
        %890 = vperm.xlu0 %889, %v887
        %v891 = vpop.permute.xlu0 %890
        %v894 = vsel %vm584, %v886, 0
        %v897 = vsel %vm588, %v884, 0
        %v900 = vsel %vm588, %v885, 0
        %902 = vmatpush.msra.mxu0 0.0
        %903 = vmatpush.msra.mxu0 0.0
        %904 = vmatpush.msra.mxu0 0.0
        %905 = vmatpush.msra.mxu0 0.0
        %906 = vmatpush.msra.mxu0 0.0
        %907 = vmatpush.msra.mxu0 0.0
        %908 = vmatpush.msra.mxu0 0.0
        %909 = vmatpush.msra.mxu0 0.0
        %910 = vmatpush.msra.mxu0 0.0
        %911 = vmatpush.msra.mxu0 0.0
        %912 = vmatpush.msra.mxu0 0.0
        %913 = vmatpush.msra.mxu0 0.0
        %914 = vmatpush.msra.mxu0 0.0
        %915 = vmatpush.msra.mxu0 0.0
        %916 = vmatpush.msra.mxu0 0.0
        %917 = vmatpush.msra.mxu0 %v897
        %918 = vmatmul.f32.gmra.mxu0 %v894
        %v919 = vpop.f32.mrf.mxu0
        %v920 = vadd.f32 %v891, %v919
        %921 = vdwg.mxu0
        %922 = vmatpush.msra.mxu0 0.0
        %923 = vmatpush.msra.mxu0 0.0
        %924 = vmatpush.msra.mxu0 0.0
        %925 = vmatpush.msra.mxu0 0.0
        %926 = vmatpush.msra.mxu0 0.0
        %927 = vmatpush.msra.mxu0 0.0
        %928 = vmatpush.msra.mxu0 0.0
        %929 = vmatpush.msra.mxu0 0.0
        %930 = vmatpush.msra.mxu0 0.0
        %931 = vmatpush.msra.mxu0 0.0
        %932 = vmatpush.msra.mxu0 0.0
        %933 = vmatpush.msra.mxu0 0.0
        %934 = vmatpush.msra.mxu0 0.0
        %935 = vmatpush.msra.mxu0 0.0
        %936 = vmatpush.msra.mxu0 0.0
        %937 = vmatpush.msra.mxu0 %v900
        %938 = vmatmul.f32.gmra.mxu0 %v894
        %v939 = vpop.f32.mrf.mxu0
        %v940 = vadd.f32 %v891, %v939
        %941 = vdwg.mxu0
        %v942 = vmax.f32 %v920, 0.0
        %v943 = vmax.f32 %v940, 0.0
        %944 = vrot.lane.b32.xlu0 %v942, 17
        %v945 = vpop.permute.xlu0 %944
        %946 = vrot.lane.b32.xlu0 %v943, 17
        %v947 = vpop.permute.xlu0 %946
        %v948 = vlaneseq
        %v949 = vand.u32 %v948, 127
        %vm950 = vcmp.lt.s32.totalorder %v949, 17
        %v951 = vsel %vm950, %v945, %v947
        %v952 = vsel %vm950, %v947, %v945
        %v953 = vld [vmem:[%s6] sm:$0x3]
        %v955 = vperm.slane %v953, 0
        %v956 = vperm.slane %v953, 1
        %v959 = vmul.f32 %v952, %v955
        %v960 = vmul.f32 %v951, %v956
        %961 = vrot.lane.b32.xlu0 %v942, 16
        %v962 = vpop.permute.xlu0 %961
        %963 = vrot.lane.b32.xlu0 %v943, 16
        %v964 = vpop.permute.xlu0 %963
        %vm965 = vcmp.lt.s32.totalorder %v949, 16
        %v966 = vsel %vm965, %v962, %v964
        %v967 = vsel %vm965, %v964, %v962
        %s968 = scalar_lea.vmem %s6, 2
        %v969 = vld [vmem:[%s968] sm:$0x3]
        %v971 = vperm.slane %v969, 0
        %v972 = vperm.slane %v969, 1
        %v975 = vmul.f32 %v967, %v971
        %v976 = vmul.f32 %v966, %v972
        %977 = vrot.lane.b32.xlu0 %v942, 15
        %v978 = vpop.permute.xlu0 %977
        %979 = vrot.lane.b32.xlu0 %v943, 15
        %v980 = vpop.permute.xlu0 %979
        %vm981 = vcmp.lt.s32.totalorder %v949, 15
        %v982 = vsel %vm981, %v978, %v980
        %v983 = vsel %vm981, %v980, %v978
        %s984 = scalar_lea.vmem %s6, 4
        %v985 = vld [vmem:[%s984] sm:$0x3]
        %v987 = vperm.slane %v985, 0
        %v988 = vperm.slane %v985, 1
        %v991 = vmul.f32 %v983, %v987
        %v992 = vmul.f32 %v982, %v988
        %993 = vrot.lane.b32.xlu0 %v942, 1
        %v994 = vpop.permute.xlu0 %993
        %995 = vrot.lane.b32.xlu0 %v943, 1
        %v996 = vpop.permute.xlu0 %995
        %vm997 = vcmp.lt.s32.totalorder %v949, 1
        %v998 = vsel %vm997, %v994, %v996
        %v999 = vsel %vm997, %v996, %v994
        %s1000 = scalar_lea.vmem %s6, 6
        %v1001 = vld [vmem:[%s1000] sm:$0x3]
        %v1003 = vperm.slane %v1001, 0
        %v1004 = vperm.slane %v1001, 1
        %v1007 = vmul.f32 %v999, %v1003
        %v1008 = vmul.f32 %v998, %v1004
        %1009 = vrot.lane.b32.xlu0 %v942, 127
        %v1010 = vpop.permute.xlu0 %1009
        %1011 = vrot.lane.b32.xlu0 %v943, 127
        %v1012 = vpop.permute.xlu0 %1011
        %vm1013 = vcmp.lt.s32.totalorder %v949, 127
        %v1014 = vsel %vm1013, %v1010, %v1012
        %v1015 = vsel %vm1013, %v1012, %v1010
        %s1016 = scalar_lea.vmem %s6, 10
        %v1017 = vld [vmem:[%s1016] sm:$0x3]
        %v1019 = vperm.slane %v1017, 0
        %v1020 = vperm.slane %v1017, 1
        %v1023 = vmul.f32 %v1014, %v1019
        %v1024 = vmul.f32 %v1015, %v1020
        %1025 = vrot.lane.b32.xlu0 %v942, 113
        %v1026 = vpop.permute.xlu0 %1025
        %1027 = vrot.lane.b32.xlu0 %v943, 113
        %v1028 = vpop.permute.xlu0 %1027
        %vm1029 = vcmp.lt.s32.totalorder %v949, 113
        %v1030 = vsel %vm1029, %v1026, %v1028
        %v1031 = vsel %vm1029, %v1028, %v1026
        %s1032 = scalar_lea.vmem %s6, 12
        %v1033 = vld [vmem:[%s1032] sm:$0x3]
        %v1035 = vperm.slane %v1033, 0
        %v1036 = vperm.slane %v1033, 1
        %v1039 = vmul.f32 %v1030, %v1035
        %v1040 = vmul.f32 %v1031, %v1036
        %1041 = vrot.lane.b32.xlu0 %v942, 112
        %v1042 = vpop.permute.xlu0 %1041
        %1043 = vrot.lane.b32.xlu0 %v943, 112
        %v1044 = vpop.permute.xlu0 %1043
        %vm1045 = vcmp.lt.s32.totalorder %v949, 112
        %v1046 = vsel %vm1045, %v1042, %v1044
        %v1047 = vsel %vm1045, %v1044, %v1042
        %s1048 = scalar_lea.vmem %s6, 14
        %v1049 = vld [vmem:[%s1048] sm:$0x3]
        %v1051 = vperm.slane %v1049, 0
        %v1052 = vperm.slane %v1049, 1
        %v1055 = vmul.f32 %v1046, %v1051
        %v1056 = vmul.f32 %v1047, %v1052
        %1057 = vrot.lane.b32.xlu0 %v942, 111
        %v1058 = vpop.permute.xlu0 %1057
        %1059 = vrot.lane.b32.xlu0 %v943, 111
        %v1060 = vpop.permute.xlu0 %1059
        %vm1061 = vcmp.lt.s32.totalorder %v949, 111
        %v1062 = vsel %vm1061, %v1058, %v1060
        %v1063 = vsel %vm1061, %v1060, %v1058
        %s1064 = scalar_lea.vmem %s6, 16
        %v1065 = vld [vmem:[%s1064] sm:$0x3]
        %v1067 = vperm.slane %v1065, 0
        %v1068 = vperm.slane %v1065, 1
        %v1071 = vmul.f32 %v1062, %v1067
        %v1072 = vmul.f32 %v1063, %v1068
        %v1073 = vld [vmem:[%s7] sm:$0xff]
        %v1074 = vld [vmem:[%s7 + $0x8] sm:$0xff]
        %v1075 = vld [vmem:[%s8] sm:$0xff]
        %v1076 = vld [vmem:[%s8 + $0x8] sm:$0xff]
        %1078 = vset.pattern.permute.xlu0 0
        %1079 = vperm.xlu0 %1078, %v1075
        %v1080 = vpop.permute.xlu0 %1079
        %1083 = vset.pattern.permute.xlu0 0
        %1084 = vperm.xlu0 %1083, %v1076
        %v1085 = vpop.permute.xlu0 %1084
        %vm1087 = vcmask 588800
        %v1089 = vsel %vm1087, %v1073, 0
        %v1092 = vsel %vm1087, %v1074, 0
        %1094 = vmatpush.msra.mxu0 0.0
        %1095 = vmatpush.msra.mxu0 0.0
        %1096 = vmatpush.msra.mxu0 0.0
        %1097 = vmatpush.msra.mxu0 0.0
        %1098 = vmatpush.msra.mxu0 0.0
        %1099 = vmatpush.msra.mxu0 0.0
        %1100 = vmatpush.msra.mxu0 0.0
        %1101 = vmatpush.msra.mxu0 %v1071
        %1102 = vmatpush.msra.mxu0 %v1055
        %1103 = vmatpush.msra.mxu0 %v1039
        %1104 = vmatpush.msra.mxu0 %v1023
        %1105 = vmatpush.msra.mxu0 %v942
        %1106 = vmatpush.msra.mxu0 %v1007
        %1107 = vmatpush.msra.mxu0 %v991
        %1108 = vmatpush.msra.mxu0 %v975
        %1109 = vmatpush.msra.mxu0 %v959
        %1110 = vmatmul.f32.gmra.mxu0 %v1089
        %v1111 = vpop.f32.mrf.mxu0
        %v1112 = vadd.f32 %v1080, %v1111
        %1113 = vmatmul.f32.gmra.mxu0 %v1092
        %v1114 = vpop.f32.mrf.mxu0
        %v1115 = vadd.f32 %v1085, %v1114
        %1116 = vdwg.mxu0
        %1117 = vmatpush.msra.mxu0 0.0
        %1118 = vmatpush.msra.mxu0 0.0
        %1119 = vmatpush.msra.mxu0 0.0
        %1120 = vmatpush.msra.mxu0 0.0
        %1121 = vmatpush.msra.mxu0 0.0
        %1122 = vmatpush.msra.mxu0 0.0
        %1123 = vmatpush.msra.mxu0 0.0
        %1124 = vmatpush.msra.mxu0 %v1072
        %1125 = vmatpush.msra.mxu0 %v1056
        %1126 = vmatpush.msra.mxu0 %v1040
        %1127 = vmatpush.msra.mxu0 %v1024
        %1128 = vmatpush.msra.mxu0 %v943
        %1129 = vmatpush.msra.mxu0 %v1008
        %1130 = vmatpush.msra.mxu0 %v992
        %1131 = vmatpush.msra.mxu0 %v976
        %1132 = vmatpush.msra.mxu0 %v960
        %1133 = vmatmul.f32.gmra.mxu0 %v1089
        %v1134 = vpop.f32.mrf.mxu0
        %v1135 = vadd.f32 %v1080, %v1134
        %1136 = vmatmul.f32.gmra.mxu0 %v1092
        %v1137 = vpop.f32.mrf.mxu0
        %v1138 = vadd.f32 %v1085, %v1137
        %1139 = vdwg.mxu0
        %v1140 = vmax.f32 %v1112, 0.0
        %v1141 = vmax.f32 %v1135, 0.0
        %v1142 = vmax.f32 %v1115, 0.0
        %v1143 = vmax.f32 %v1138, 0.0
        %1144 = vrot.lane.b32.xlu0 %v1140, 17
        %v1145 = vpop.permute.xlu0 %1144
        %1146 = vrot.lane.b32.xlu0 %v1142, 17
        %v1147 = vpop.permute.xlu0 %1146
        %1148 = vrot.lane.b32.xlu0 %v1141, 17
        %v1149 = vpop.permute.xlu0 %1148
        %1150 = vrot.lane.b32.xlu0 %v1143, 17
        %v1151 = vpop.permute.xlu0 %1150
        %v1152 = vsel %vm950, %v1145, %v1149
        %v1153 = vsel %vm950, %v1147, %v1151
        %v1154 = vsel %vm950, %v1149, %v1145
        %v1155 = vsel %vm950, %v1151, %v1147
        %v1156 = vmul.f32 %v1154, %v955
        %v1157 = vmul.f32 %v1152, %v956
        %v1158 = vmul.f32 %v1155, %v955
        %v1159 = vmul.f32 %v1153, %v956
        %1160 = vrot.lane.b32.xlu0 %v1140, 16
        %v1161 = vpop.permute.xlu0 %1160
        %1162 = vrot.lane.b32.xlu0 %v1142, 16
        %v1163 = vpop.permute.xlu0 %1162
        %1164 = vrot.lane.b32.xlu0 %v1141, 16
        %v1165 = vpop.permute.xlu0 %1164
        %1166 = vrot.lane.b32.xlu0 %v1143, 16
        %v1167 = vpop.permute.xlu0 %1166
        %v1168 = vsel %vm965, %v1161, %v1165
        %v1169 = vsel %vm965, %v1163, %v1167
        %v1170 = vsel %vm965, %v1165, %v1161
        %v1171 = vsel %vm965, %v1167, %v1163
        %v1172 = vmul.f32 %v1170, %v971
        %v1173 = vmul.f32 %v1168, %v972
        %v1174 = vmul.f32 %v1171, %v971
        %v1175 = vmul.f32 %v1169, %v972
        %1176 = vrot.lane.b32.xlu0 %v1140, 15
        %v1177 = vpop.permute.xlu0 %1176
        %1178 = vrot.lane.b32.xlu0 %v1142, 15
        %v1179 = vpop.permute.xlu0 %1178
        %1180 = vrot.lane.b32.xlu0 %v1141, 15
        %v1181 = vpop.permute.xlu0 %1180
        %1182 = vrot.lane.b32.xlu0 %v1143, 15
        %v1183 = vpop.permute.xlu0 %1182
        %v1184 = vsel %vm981, %v1177, %v1181
        %v1185 = vsel %vm981, %v1179, %v1183
        %v1186 = vsel %vm981, %v1181, %v1177
        %v1187 = vsel %vm981, %v1183, %v1179
        %v1188 = vmul.f32 %v1186, %v987
        %v1189 = vmul.f32 %v1184, %v988
        %v1190 = vmul.f32 %v1187, %v987
        %v1191 = vmul.f32 %v1185, %v988
        %1192 = vrot.lane.b32.xlu0 %v1140, 1
        %v1193 = vpop.permute.xlu0 %1192
        %1194 = vrot.lane.b32.xlu0 %v1142, 1
        %v1195 = vpop.permute.xlu0 %1194
        %1196 = vrot.lane.b32.xlu0 %v1141, 1
        %v1197 = vpop.permute.xlu0 %1196
        %1198 = vrot.lane.b32.xlu0 %v1143, 1
        %v1199 = vpop.permute.xlu0 %1198
        %v1200 = vsel %vm997, %v1193, %v1197
        %v1201 = vsel %vm997, %v1195, %v1199
        %v1202 = vsel %vm997, %v1197, %v1193
        %v1203 = vsel %vm997, %v1199, %v1195
        %v1204 = vmul.f32 %v1202, %v1003
        %v1205 = vmul.f32 %v1200, %v1004
        %v1206 = vmul.f32 %v1203, %v1003
        %v1207 = vmul.f32 %v1201, %v1004
        %1208 = vrot.lane.b32.xlu0 %v1140, 127
        %v1209 = vpop.permute.xlu0 %1208
        %1210 = vrot.lane.b32.xlu0 %v1142, 127
        %v1211 = vpop.permute.xlu0 %1210
        %1212 = vrot.lane.b32.xlu0 %v1141, 127
        %v1213 = vpop.permute.xlu0 %1212
        %1214 = vrot.lane.b32.xlu0 %v1143, 127
        %v1215 = vpop.permute.xlu0 %1214
        %v1216 = vsel %vm1013, %v1209, %v1213
        %v1217 = vsel %vm1013, %v1211, %v1215
        %v1218 = vsel %vm1013, %v1213, %v1209
        %v1219 = vsel %vm1013, %v1215, %v1211
        %v1220 = vmul.f32 %v1216, %v1019
        %v1221 = vmul.f32 %v1218, %v1020
        %v1222 = vmul.f32 %v1217, %v1019
        %v1223 = vmul.f32 %v1219, %v1020
        %1224 = vrot.lane.b32.xlu0 %v1140, 113
        %v1225 = vpop.permute.xlu0 %1224
        %1226 = vrot.lane.b32.xlu0 %v1142, 113
        %v1227 = vpop.permute.xlu0 %1226
        %1228 = vrot.lane.b32.xlu0 %v1141, 113
        %v1229 = vpop.permute.xlu0 %1228
        %1230 = vrot.lane.b32.xlu0 %v1143, 113
        %v1231 = vpop.permute.xlu0 %1230
        %v1232 = vsel %vm1029, %v1225, %v1229
        %v1233 = vsel %vm1029, %v1227, %v1231
        %v1234 = vsel %vm1029, %v1229, %v1225
        %v1235 = vsel %vm1029, %v1231, %v1227
        %v1236 = vmul.f32 %v1232, %v1035
        %v1237 = vmul.f32 %v1234, %v1036
        %v1238 = vmul.f32 %v1233, %v1035
        %v1239 = vmul.f32 %v1235, %v1036
        %1240 = vrot.lane.b32.xlu0 %v1140, 112
        %v1241 = vpop.permute.xlu0 %1240
        %1242 = vrot.lane.b32.xlu0 %v1142, 112
        %v1243 = vpop.permute.xlu0 %1242
        %1244 = vrot.lane.b32.xlu0 %v1141, 112
        %v1245 = vpop.permute.xlu0 %1244
        %1246 = vrot.lane.b32.xlu0 %v1143, 112
        %v1247 = vpop.permute.xlu0 %1246
        %v1248 = vsel %vm1045, %v1241, %v1245
        %v1249 = vsel %vm1045, %v1243, %v1247
        %v1250 = vsel %vm1045, %v1245, %v1241
        %v1251 = vsel %vm1045, %v1247, %v1243
        %v1252 = vmul.f32 %v1248, %v1051
        %v1253 = vmul.f32 %v1250, %v1052
        %v1254 = vmul.f32 %v1249, %v1051
        %v1255 = vmul.f32 %v1251, %v1052
        %1256 = vrot.lane.b32.xlu0 %v1140, 111
        %v1257 = vpop.permute.xlu0 %1256
        %1258 = vrot.lane.b32.xlu0 %v1142, 111
        %v1259 = vpop.permute.xlu0 %1258
        %1260 = vrot.lane.b32.xlu0 %v1141, 111
        %v1261 = vpop.permute.xlu0 %1260
        %1262 = vrot.lane.b32.xlu0 %v1143, 111
        %v1263 = vpop.permute.xlu0 %1262
        %v1264 = vsel %vm1061, %v1257, %v1261
        %v1265 = vsel %vm1061, %v1259, %v1263
        %v1266 = vsel %vm1061, %v1261, %v1257
        %v1267 = vsel %vm1061, %v1263, %v1259
        %v1268 = vmul.f32 %v1264, %v1067
        %v1269 = vmul.f32 %v1266, %v1068
        %v1270 = vmul.f32 %v1265, %v1067
        %v1271 = vmul.f32 %v1267, %v1068
        %v1272 = vld [vmem:[%s9] sm:$0xff]
        %v1273 = vld [vmem:[%s9 + $0x8] sm:$0xff]
        %v1274 = vld [vmem:[%s9 + $0x10] sm:$0xff]
        %v1275 = vld [vmem:[%s9 + $0x18] sm:$0xff]
        %v1276 = vld [vmem:[%s10] sm:$0xff]
        %v1277 = vld [vmem:[%s10 + $0x8] sm:$0xff]
        %1279 = vset.pattern.permute.xlu0 0
        %1280 = vperm.xlu0 %1279, %v1276
        %v1281 = vpop.permute.xlu0 %1280
        %1284 = vset.pattern.permute.xlu0 0
        %1285 = vperm.xlu0 %1284, %v1277
        %v1286 = vpop.permute.xlu0 %1285
        %vm1288 = vcmask 130048
        %v1290 = vsel %vm1288, %v1273, 0
        %v1293 = vsel %vm1288, %v1275, 0
        %1295 = vmatpush.msra.mxu0 %v1254
        %1296 = vmatpush.msra.mxu0 %v1252
        %1297 = vmatpush.msra.mxu0 %v1238
        %1298 = vmatpush.msra.mxu0 %v1236
        %1299 = vmatpush.msra.mxu0 %v1222
        %1300 = vmatpush.msra.mxu0 %v1220
        %1301 = vmatpush.msra.mxu0 %v1142
        %1302 = vmatpush.msra.mxu0 %v1140
        %1303 = vmatpush.msra.mxu0 %v1206
        %1304 = vmatpush.msra.mxu0 %v1204
        %1305 = vmatpush.msra.mxu0 %v1190
        %1306 = vmatpush.msra.mxu0 %v1188
        %1307 = vmatpush.msra.mxu0 %v1174
        %1308 = vmatpush.msra.mxu0 %v1172
        %1309 = vmatpush.msra.mxu0 %v1158
        %1310 = vmatpush.msra.mxu0 %v1156
        %1311 = vmatmul.f32.gmra.mxu0 %v1272
        %v1312 = vpop.f32.mrf.mxu0
        %v1313 = vadd.f32 %v1281, %v1312
        %1314 = vmatmul.f32.gmra.mxu0 %v1274
        %v1315 = vpop.f32.mrf.mxu0
        %v1316 = vadd.f32 %v1286, %v1315
        %1317 = vdwg.mxu0
        %1318 = vmatpush.msra.mxu0 0.0
        %1319 = vmatpush.msra.mxu0 0.0
        %1320 = vmatpush.msra.mxu0 0.0
        %1321 = vmatpush.msra.mxu0 0.0
        %1322 = vmatpush.msra.mxu0 0.0
        %1323 = vmatpush.msra.mxu0 0.0
        %1324 = vmatpush.msra.mxu0 0.0
        %1325 = vmatpush.msra.mxu0 0.0
        %1326 = vmatpush.msra.mxu0 0.0
        %1327 = vmatpush.msra.mxu0 0.0
        %1328 = vmatpush.msra.mxu0 0.0
        %1329 = vmatpush.msra.mxu0 0.0
        %1330 = vmatpush.msra.mxu0 0.0
        %1331 = vmatpush.msra.mxu0 0.0
        %1332 = vmatpush.msra.mxu0 %v1270
        %1333 = vmatpush.msra.mxu0 %v1268
        %1334 = vmatmul.f32.gmra.mxu0 %v1290
        %v1335 = vpop.f32.mrf.mxu0
        %v1336 = vadd.f32 %v1313, %v1335
        %1337 = vmatmul.f32.gmra.mxu0 %v1293
        %v1338 = vpop.f32.mrf.mxu0
        %v1339 = vadd.f32 %v1316, %v1338
        %1340 = vdwg.mxu0
        %1341 = vmatpush.msra.mxu0 %v1255
        %1342 = vmatpush.msra.mxu0 %v1253
        %1343 = vmatpush.msra.mxu0 %v1239
        %1344 = vmatpush.msra.mxu0 %v1237
        %1345 = vmatpush.msra.mxu0 %v1223
        %1346 = vmatpush.msra.mxu0 %v1221
        %1347 = vmatpush.msra.mxu0 %v1143
        %1348 = vmatpush.msra.mxu0 %v1141
        %1349 = vmatpush.msra.mxu0 %v1207
        %1350 = vmatpush.msra.mxu0 %v1205
        %1351 = vmatpush.msra.mxu0 %v1191
        %1352 = vmatpush.msra.mxu0 %v1189
        %1353 = vmatpush.msra.mxu0 %v1175
        %1354 = vmatpush.msra.mxu0 %v1173
        %1355 = vmatpush.msra.mxu0 %v1159
        %1356 = vmatpush.msra.mxu0 %v1157
        %1357 = vmatmul.f32.gmra.mxu0 %v1272
        %v1358 = vpop.f32.mrf.mxu0
        %v1359 = vadd.f32 %v1281, %v1358
        %1360 = vmatmul.f32.gmra.mxu0 %v1274
        %v1361 = vpop.f32.mrf.mxu0
        %v1362 = vadd.f32 %v1286, %v1361
        %1363 = vdwg.mxu0
        %1364 = vmatpush.msra.mxu0 0.0
        %1365 = vmatpush.msra.mxu0 0.0
        %1366 = vmatpush.msra.mxu0 0.0
        %1367 = vmatpush.msra.mxu0 0.0
        %1368 = vmatpush.msra.mxu0 0.0
        %1369 = vmatpush.msra.mxu0 0.0
        %1370 = vmatpush.msra.mxu0 0.0
        %1371 = vmatpush.msra.mxu0 0.0
        %1372 = vmatpush.msra.mxu0 0.0
        %1373 = vmatpush.msra.mxu0 0.0
        %1374 = vmatpush.msra.mxu0 0.0
        %1375 = vmatpush.msra.mxu0 0.0
        %1376 = vmatpush.msra.mxu0 0.0
        %1377 = vmatpush.msra.mxu0 0.0
        %1378 = vmatpush.msra.mxu0 %v1271
        %1379 = vmatpush.msra.mxu0 %v1269
        %1380 = vmatmul.f32.gmra.mxu0 %v1290
        %v1381 = vpop.f32.mrf.mxu0
        %v1382 = vadd.f32 %v1359, %v1381
        %1383 = vmatmul.f32.gmra.mxu0 %v1293
        %v1384 = vpop.f32.mrf.mxu0
        %v1385 = vadd.f32 %v1362, %v1384
        %1386 = vdwg.mxu0
        %v1387 = vmax.f32 %v1336, 0.0
        %v1388 = vmax.f32 %v1382, 0.0
        %v1389 = vmax.f32 %v1339, 0.0
        %v1390 = vmax.f32 %v1385, 0.0
        %1391 = vrot.lane.b32.xlu0 %v1387, 17
        %v1392 = vpop.permute.xlu0 %1391
        %1393 = vrot.lane.b32.xlu0 %v1389, 17
        %v1394 = vpop.permute.xlu0 %1393
        %1395 = vrot.lane.b32.xlu0 %v1388, 17
        %v1396 = vpop.permute.xlu0 %1395
        %1397 = vrot.lane.b32.xlu0 %v1390, 17
        %v1398 = vpop.permute.xlu0 %1397
        %v1399 = vsel %vm950, %v1392, %v1396
        %v1400 = vsel %vm950, %v1394, %v1398
        %v1401 = vsel %vm950, %v1396, %v1392
        %v1402 = vsel %vm950, %v1398, %v1394
        %v1403 = vmul.f32 %v1401, %v955
        %v1404 = vmul.f32 %v1399, %v956
        %v1405 = vmul.f32 %v1402, %v955
        %v1406 = vmul.f32 %v1400, %v956
        %1407 = vrot.lane.b32.xlu0 %v1387, 16
        %v1408 = vpop.permute.xlu0 %1407
        %1409 = vrot.lane.b32.xlu0 %v1389, 16
        %v1410 = vpop.permute.xlu0 %1409
        %1411 = vrot.lane.b32.xlu0 %v1388, 16
        %v1412 = vpop.permute.xlu0 %1411
        %1413 = vrot.lane.b32.xlu0 %v1390, 16
        %v1414 = vpop.permute.xlu0 %1413
        %v1415 = vsel %vm965, %v1408, %v1412
        %v1416 = vsel %vm965, %v1410, %v1414
        %v1417 = vsel %vm965, %v1412, %v1408
        %v1418 = vsel %vm965, %v1414, %v1410
        %v1419 = vmul.f32 %v1417, %v971
        %v1420 = vmul.f32 %v1415, %v972
        %v1421 = vmul.f32 %v1418, %v971
        %v1422 = vmul.f32 %v1416, %v972
        %1423 = vrot.lane.b32.xlu0 %v1387, 15
        %v1424 = vpop.permute.xlu0 %1423
        %1425 = vrot.lane.b32.xlu0 %v1389, 15
        %v1426 = vpop.permute.xlu0 %1425
        %1427 = vrot.lane.b32.xlu0 %v1388, 15
        %v1428 = vpop.permute.xlu0 %1427
        %1429 = vrot.lane.b32.xlu0 %v1390, 15
        %v1430 = vpop.permute.xlu0 %1429
        %v1431 = vsel %vm981, %v1424, %v1428
        %v1432 = vsel %vm981, %v1426, %v1430
        %v1433 = vsel %vm981, %v1428, %v1424
        %v1434 = vsel %vm981, %v1430, %v1426
        %v1435 = vmul.f32 %v1433, %v987
        %v1436 = vmul.f32 %v1431, %v988
        %v1437 = vmul.f32 %v1434, %v987
        %v1438 = vmul.f32 %v1432, %v988
        %1439 = vrot.lane.b32.xlu0 %v1387, 1
        %v1440 = vpop.permute.xlu0 %1439
        %1441 = vrot.lane.b32.xlu0 %v1389, 1
        %v1442 = vpop.permute.xlu0 %1441
        %1443 = vrot.lane.b32.xlu0 %v1388, 1
        %v1444 = vpop.permute.xlu0 %1443
        %1445 = vrot.lane.b32.xlu0 %v1390, 1
        %v1446 = vpop.permute.xlu0 %1445
        %v1447 = vsel %vm997, %v1440, %v1444
        %v1448 = vsel %vm997, %v1442, %v1446
        %v1449 = vsel %vm997, %v1444, %v1440
        %v1450 = vsel %vm997, %v1446, %v1442
        %v1451 = vmul.f32 %v1449, %v1003
        %v1452 = vmul.f32 %v1447, %v1004
        %v1453 = vmul.f32 %v1450, %v1003
        %v1454 = vmul.f32 %v1448, %v1004
        %1455 = vrot.lane.b32.xlu0 %v1387, 127
        %v1456 = vpop.permute.xlu0 %1455
        %1457 = vrot.lane.b32.xlu0 %v1389, 127
        %v1458 = vpop.permute.xlu0 %1457
        %1459 = vrot.lane.b32.xlu0 %v1388, 127
        %v1460 = vpop.permute.xlu0 %1459
        %1461 = vrot.lane.b32.xlu0 %v1390, 127
        %v1462 = vpop.permute.xlu0 %1461
        %v1463 = vsel %vm1013, %v1456, %v1460
        %v1464 = vsel %vm1013, %v1458, %v1462
        %v1465 = vsel %vm1013, %v1460, %v1456
        %v1466 = vsel %vm1013, %v1462, %v1458
        %v1467 = vmul.f32 %v1463, %v1019
        %v1468 = vmul.f32 %v1465, %v1020
        %v1469 = vmul.f32 %v1464, %v1019
        %v1470 = vmul.f32 %v1466, %v1020
        %1471 = vrot.lane.b32.xlu0 %v1387, 113
        %v1472 = vpop.permute.xlu0 %1471
        %1473 = vrot.lane.b32.xlu0 %v1389, 113
        %v1474 = vpop.permute.xlu0 %1473
        %1475 = vrot.lane.b32.xlu0 %v1388, 113
        %v1476 = vpop.permute.xlu0 %1475
        %1477 = vrot.lane.b32.xlu0 %v1390, 113
        %v1478 = vpop.permute.xlu0 %1477
        %v1479 = vsel %vm1029, %v1472, %v1476
        %v1480 = vsel %vm1029, %v1474, %v1478
        %v1481 = vsel %vm1029, %v1476, %v1472
        %v1482 = vsel %vm1029, %v1478, %v1474
        %v1483 = vmul.f32 %v1479, %v1035
        %v1484 = vmul.f32 %v1481, %v1036
        %v1485 = vmul.f32 %v1480, %v1035
        %v1486 = vmul.f32 %v1482, %v1036
        %1487 = vrot.lane.b32.xlu0 %v1387, 112
        %v1488 = vpop.permute.xlu0 %1487
        %1489 = vrot.lane.b32.xlu0 %v1389, 112
        %v1490 = vpop.permute.xlu0 %1489
        %1491 = vrot.lane.b32.xlu0 %v1388, 112
        %v1492 = vpop.permute.xlu0 %1491
        %1493 = vrot.lane.b32.xlu0 %v1390, 112
        %v1494 = vpop.permute.xlu0 %1493
        %v1495 = vsel %vm1045, %v1488, %v1492
        %v1496 = vsel %vm1045, %v1490, %v1494
        %v1497 = vsel %vm1045, %v1492, %v1488
        %v1498 = vsel %vm1045, %v1494, %v1490
        %v1499 = vmul.f32 %v1495, %v1051
        %v1500 = vmul.f32 %v1497, %v1052
        %v1501 = vmul.f32 %v1496, %v1051
        %v1502 = vmul.f32 %v1498, %v1052
        %1503 = vrot.lane.b32.xlu0 %v1387, 111
        %v1504 = vpop.permute.xlu0 %1503
        %1505 = vrot.lane.b32.xlu0 %v1389, 111
        %v1506 = vpop.permute.xlu0 %1505
        %1507 = vrot.lane.b32.xlu0 %v1388, 111
        %v1508 = vpop.permute.xlu0 %1507
        %1509 = vrot.lane.b32.xlu0 %v1390, 111
        %v1510 = vpop.permute.xlu0 %1509
        %v1511 = vsel %vm1061, %v1504, %v1508
        %v1512 = vsel %vm1061, %v1506, %v1510
        %v1513 = vsel %vm1061, %v1508, %v1504
        %v1514 = vsel %vm1061, %v1510, %v1506
        %v1515 = vmul.f32 %v1511, %v1067
        %v1516 = vmul.f32 %v1513, %v1068
        %v1517 = vmul.f32 %v1512, %v1067
        %v1518 = vmul.f32 %v1514, %v1068
        %v1519 = vld [vmem:[%s11] sm:$0xff]
        %v1520 = vld [vmem:[%s11 + $0x8] sm:$0xff]
        %v1521 = vld [vmem:[%s11 + $0x10] sm:$0xff]
        %v1522 = vld [vmem:[%s11 + $0x18] sm:$0xff]
        %v1523 = vld [vmem:[%s12] sm:$0xff]
        %v1524 = vld [vmem:[%s12 + $0x8] sm:$0xff]
        %1526 = vset.pattern.permute.xlu0 0
        %1527 = vperm.xlu0 %1526, %v1523
        %v1528 = vpop.permute.xlu0 %1527
        %1531 = vset.pattern.permute.xlu0 0
        %1532 = vperm.xlu0 %1531, %v1524
        %v1533 = vpop.permute.xlu0 %1532
        %v1536 = vsel %vm1288, %v1520, 0
        %v1539 = vsel %vm1288, %v1522, 0
        %1541 = vmatpush.msra.mxu0 %v1501
        %1542 = vmatpush.msra.mxu0 %v1499
        %1543 = vmatpush.msra.mxu0 %v1485
        %1544 = vmatpush.msra.mxu0 %v1483
        %1545 = vmatpush.msra.mxu0 %v1469
        %1546 = vmatpush.msra.mxu0 %v1467
        %1547 = vmatpush.msra.mxu0 %v1389
        %1548 = vmatpush.msra.mxu0 %v1387
        %1549 = vmatpush.msra.mxu0 %v1453
        %1550 = vmatpush.msra.mxu0 %v1451
        %1551 = vmatpush.msra.mxu0 %v1437
        %1552 = vmatpush.msra.mxu0 %v1435
        %1553 = vmatpush.msra.mxu0 %v1421
        %1554 = vmatpush.msra.mxu0 %v1419
        %1555 = vmatpush.msra.mxu0 %v1405
        %1556 = vmatpush.msra.mxu0 %v1403
        %1557 = vmatmul.f32.gmra.mxu0 %v1519
        %v1558 = vpop.f32.mrf.mxu0
        %v1559 = vadd.f32 %v1528, %v1558
        %1560 = vmatmul.f32.gmra.mxu0 %v1521
        %v1561 = vpop.f32.mrf.mxu0
        %v1562 = vadd.f32 %v1533, %v1561
        %1563 = vdwg.mxu0
        %1564 = vmatpush.msra.mxu0 0.0
        %1565 = vmatpush.msra.mxu0 0.0
        %1566 = vmatpush.msra.mxu0 0.0
        %1567 = vmatpush.msra.mxu0 0.0
        %1568 = vmatpush.msra.mxu0 0.0
        %1569 = vmatpush.msra.mxu0 0.0
        %1570 = vmatpush.msra.mxu0 0.0
        %1571 = vmatpush.msra.mxu0 0.0
        %1572 = vmatpush.msra.mxu0 0.0
        %1573 = vmatpush.msra.mxu0 0.0
        %1574 = vmatpush.msra.mxu0 0.0
        %1575 = vmatpush.msra.mxu0 0.0
        %1576 = vmatpush.msra.mxu0 0.0
        %1577 = vmatpush.msra.mxu0 0.0
        %1578 = vmatpush.msra.mxu0 %v1517
        %1579 = vmatpush.msra.mxu0 %v1515
        %1580 = vmatmul.f32.gmra.mxu0 %v1536
        %v1581 = vpop.f32.mrf.mxu0
        %v1582 = vadd.f32 %v1559, %v1581
        %1583 = vmatmul.f32.gmra.mxu0 %v1539
        %v1584 = vpop.f32.mrf.mxu0
        %v1585 = vadd.f32 %v1562, %v1584
        %1586 = vdwg.mxu0
        %1587 = vmatpush.msra.mxu0 %v1502
        %1588 = vmatpush.msra.mxu0 %v1500
        %1589 = vmatpush.msra.mxu0 %v1486
        %1590 = vmatpush.msra.mxu0 %v1484
        %1591 = vmatpush.msra.mxu0 %v1470
        %1592 = vmatpush.msra.mxu0 %v1468
        %1593 = vmatpush.msra.mxu0 %v1390
        %1594 = vmatpush.msra.mxu0 %v1388
        %1595 = vmatpush.msra.mxu0 %v1454
        %1596 = vmatpush.msra.mxu0 %v1452
        %1597 = vmatpush.msra.mxu0 %v1438
        %1598 = vmatpush.msra.mxu0 %v1436
        %1599 = vmatpush.msra.mxu0 %v1422
        %1600 = vmatpush.msra.mxu0 %v1420
        %1601 = vmatpush.msra.mxu0 %v1406
        %1602 = vmatpush.msra.mxu0 %v1404
        %1603 = vmatmul.f32.gmra.mxu0 %v1519
        %v1604 = vpop.f32.mrf.mxu0
        %v1605 = vadd.f32 %v1528, %v1604
        %1606 = vmatmul.f32.gmra.mxu0 %v1521
        %v1607 = vpop.f32.mrf.mxu0
        %v1608 = vadd.f32 %v1533, %v1607
        %1609 = vdwg.mxu0
        %1610 = vmatpush.msra.mxu0 0.0
        %1611 = vmatpush.msra.mxu0 0.0
        %1612 = vmatpush.msra.mxu0 0.0
        %1613 = vmatpush.msra.mxu0 0.0
        %1614 = vmatpush.msra.mxu0 0.0
        %1615 = vmatpush.msra.mxu0 0.0
        %1616 = vmatpush.msra.mxu0 0.0
        %1617 = vmatpush.msra.mxu0 0.0
        %1618 = vmatpush.msra.mxu0 0.0
        %1619 = vmatpush.msra.mxu0 0.0
        %1620 = vmatpush.msra.mxu0 0.0
        %1621 = vmatpush.msra.mxu0 0.0
        %1622 = vmatpush.msra.mxu0 0.0
        %1623 = vmatpush.msra.mxu0 0.0
        %1624 = vmatpush.msra.mxu0 %v1518
        %1625 = vmatpush.msra.mxu0 %v1516
        %1626 = vmatmul.f32.gmra.mxu0 %v1536
        %v1627 = vpop.f32.mrf.mxu0
        %v1628 = vadd.f32 %v1605, %v1627
        %1629 = vmatmul.f32.gmra.mxu0 %v1539
        %v1630 = vpop.f32.mrf.mxu0
        %v1631 = vadd.f32 %v1608, %v1630
        %1632 = vdwg.mxu0
        %v1633 = vadd.f32 %v1140, %v1582
        %v1634 = vadd.f32 %v1141, %v1628
        %v1635 = vadd.f32 %v1142, %v1585
        %v1636 = vadd.f32 %v1143, %v1631
        %v1637 = vmax.f32 %v1633, 0.0
        %v1638 = vmax.f32 %v1634, 0.0
        %v1639 = vmax.f32 %v1635, 0.0
        %v1640 = vmax.f32 %v1636, 0.0
        %1641 = vrot.lane.b32.xlu0 %v1637, 17
        %v1642 = vpop.permute.xlu0 %1641
        %1643 = vrot.lane.b32.xlu0 %v1639, 17
        %v1644 = vpop.permute.xlu0 %1643
        %1645 = vrot.lane.b32.xlu0 %v1638, 17
        %v1646 = vpop.permute.xlu0 %1645
        %1647 = vrot.lane.b32.xlu0 %v1640, 17
        %v1648 = vpop.permute.xlu0 %1647
        %v1649 = vsel %vm950, %v1642, %v1646
        %v1650 = vsel %vm950, %v1644, %v1648
        %v1651 = vsel %vm950, %v1646, %v1642
        %v1652 = vsel %vm950, %v1648, %v1644
        %v1653 = vmul.f32 %v1651, %v955
        %v1654 = vmul.f32 %v1649, %v956
        %v1655 = vmul.f32 %v1652, %v955
        %v1656 = vmul.f32 %v1650, %v956
        %1657 = vrot.lane.b32.xlu0 %v1637, 16
        %v1658 = vpop.permute.xlu0 %1657
        %1659 = vrot.lane.b32.xlu0 %v1639, 16
        %v1660 = vpop.permute.xlu0 %1659
        %1661 = vrot.lane.b32.xlu0 %v1638, 16
        %v1662 = vpop.permute.xlu0 %1661
        %1663 = vrot.lane.b32.xlu0 %v1640, 16
        %v1664 = vpop.permute.xlu0 %1663
        %v1665 = vsel %vm965, %v1658, %v1662
        %v1666 = vsel %vm965, %v1660, %v1664
        %v1667 = vsel %vm965, %v1662, %v1658
        %v1668 = vsel %vm965, %v1664, %v1660
        %v1669 = vmul.f32 %v1667, %v971
        %v1670 = vmul.f32 %v1665, %v972
        %v1671 = vmul.f32 %v1668, %v971
        %v1672 = vmul.f32 %v1666, %v972
        %1673 = vrot.lane.b32.xlu0 %v1637, 15
        %v1674 = vpop.permute.xlu0 %1673
        %1675 = vrot.lane.b32.xlu0 %v1639, 15
        %v1676 = vpop.permute.xlu0 %1675
        %1677 = vrot.lane.b32.xlu0 %v1638, 15
        %v1678 = vpop.permute.xlu0 %1677
        %1679 = vrot.lane.b32.xlu0 %v1640, 15
        %v1680 = vpop.permute.xlu0 %1679
        %v1681 = vsel %vm981, %v1674, %v1678
        %v1682 = vsel %vm981, %v1676, %v1680
        %v1683 = vsel %vm981, %v1678, %v1674
        %v1684 = vsel %vm981, %v1680, %v1676
        %v1685 = vmul.f32 %v1683, %v987
        %v1686 = vmul.f32 %v1681, %v988
        %v1687 = vmul.f32 %v1684, %v987
        %v1688 = vmul.f32 %v1682, %v988
        %1689 = vrot.lane.b32.xlu0 %v1637, 1
        %v1690 = vpop.permute.xlu0 %1689
        %1691 = vrot.lane.b32.xlu0 %v1639, 1
        %v1692 = vpop.permute.xlu0 %1691
        %1693 = vrot.lane.b32.xlu0 %v1638, 1
        %v1694 = vpop.permute.xlu0 %1693
        %1695 = vrot.lane.b32.xlu0 %v1640, 1
        %v1696 = vpop.permute.xlu0 %1695
        %v1697 = vsel %vm997, %v1690, %v1694
        %v1698 = vsel %vm997, %v1692, %v1696
        %v1699 = vsel %vm997, %v1694, %v1690
        %v1700 = vsel %vm997, %v1696, %v1692
        %v1701 = vmul.f32 %v1699, %v1003
        %v1702 = vmul.f32 %v1697, %v1004
        %v1703 = vmul.f32 %v1700, %v1003
        %v1704 = vmul.f32 %v1698, %v1004
        %1705 = vrot.lane.b32.xlu0 %v1637, 127
        %v1706 = vpop.permute.xlu0 %1705
        %1707 = vrot.lane.b32.xlu0 %v1639, 127
        %v1708 = vpop.permute.xlu0 %1707
        %1709 = vrot.lane.b32.xlu0 %v1638, 127
        %v1710 = vpop.permute.xlu0 %1709
        %1711 = vrot.lane.b32.xlu0 %v1640, 127
        %v1712 = vpop.permute.xlu0 %1711
        %v1713 = vsel %vm1013, %v1706, %v1710
        %v1714 = vsel %vm1013, %v1708, %v1712
        %v1715 = vsel %vm1013, %v1710, %v1706
        %v1716 = vsel %vm1013, %v1712, %v1708
        %v1717 = vmul.f32 %v1713, %v1019
        %v1718 = vmul.f32 %v1715, %v1020
        %v1719 = vmul.f32 %v1714, %v1019
        %v1720 = vmul.f32 %v1716, %v1020
        %1721 = vrot.lane.b32.xlu0 %v1637, 113
        %v1722 = vpop.permute.xlu0 %1721
        %1723 = vrot.lane.b32.xlu0 %v1639, 113
        %v1724 = vpop.permute.xlu0 %1723
        %1725 = vrot.lane.b32.xlu0 %v1638, 113
        %v1726 = vpop.permute.xlu0 %1725
        %1727 = vrot.lane.b32.xlu0 %v1640, 113
        %v1728 = vpop.permute.xlu0 %1727
        %v1729 = vsel %vm1029, %v1722, %v1726
        %v1730 = vsel %vm1029, %v1724, %v1728
        %v1731 = vsel %vm1029, %v1726, %v1722
        %v1732 = vsel %vm1029, %v1728, %v1724
        %v1733 = vmul.f32 %v1729, %v1035
        %v1734 = vmul.f32 %v1731, %v1036
        %v1735 = vmul.f32 %v1730, %v1035
        %v1736 = vmul.f32 %v1732, %v1036
        %1737 = vrot.lane.b32.xlu0 %v1637, 112
        %v1738 = vpop.permute.xlu0 %1737
        %1739 = vrot.lane.b32.xlu0 %v1639, 112
        %v1740 = vpop.permute.xlu0 %1739
        %1741 = vrot.lane.b32.xlu0 %v1638, 112
        %v1742 = vpop.permute.xlu0 %1741
        %1743 = vrot.lane.b32.xlu0 %v1640, 112
        %v1744 = vpop.permute.xlu0 %1743
        %v1745 = vsel %vm1045, %v1738, %v1742
        %v1746 = vsel %vm1045, %v1740, %v1744
        %v1747 = vsel %vm1045, %v1742, %v1738
        %v1748 = vsel %vm1045, %v1744, %v1740
        %v1749 = vmul.f32 %v1745, %v1051
        %v1750 = vmul.f32 %v1747, %v1052
        %v1751 = vmul.f32 %v1746, %v1051
        %v1752 = vmul.f32 %v1748, %v1052
        %1753 = vrot.lane.b32.xlu0 %v1637, 111
        %v1754 = vpop.permute.xlu0 %1753
        %1755 = vrot.lane.b32.xlu0 %v1639, 111
        %v1756 = vpop.permute.xlu0 %1755
        %1757 = vrot.lane.b32.xlu0 %v1638, 111
        %v1758 = vpop.permute.xlu0 %1757
        %1759 = vrot.lane.b32.xlu0 %v1640, 111
        %v1760 = vpop.permute.xlu0 %1759
        %v1761 = vsel %vm1061, %v1754, %v1758
        %v1762 = vsel %vm1061, %v1756, %v1760
        %v1763 = vsel %vm1061, %v1758, %v1754
        %v1764 = vsel %vm1061, %v1760, %v1756
        %v1765 = vmul.f32 %v1761, %v1067
        %v1766 = vmul.f32 %v1763, %v1068
        %v1767 = vmul.f32 %v1762, %v1067
        %v1768 = vmul.f32 %v1764, %v1068
        %v1769 = vld [vmem:[%s13] sm:$0xff]
        %v1770 = vld [vmem:[%s14] sm:$0xf]
        %1772 = vset.pattern.permute.xlu0 0
        %1773 = vperm.xlu0 %1772, %v1770
        %v1774 = vpop.permute.xlu0 %1773
        %1777 = vst [vmem:[#allocation1] ss:$2 sm:$0xff] %v1769
        %v1778 = vld.sshfl [vmem:[#allocation1] sm:$0xff pattern:$0x75316420]
        %v1779 = vld.sshfl [vmem:[#allocation1 + $0x8] sm:$0xff pattern:$0x75316420]
        %v1781 = vsel %vm1288, %v1779, 0
        %1783 = vmatpush.msra.mxu0 %v1751
        %1784 = vmatpush.msra.mxu0 %v1749
        %1785 = vmatpush.msra.mxu0 %v1735
        %1786 = vmatpush.msra.mxu0 %v1733
        %1787 = vmatpush.msra.mxu0 %v1719
        %1788 = vmatpush.msra.mxu0 %v1717
        %1789 = vmatpush.msra.mxu0 %v1639
        %1790 = vmatpush.msra.mxu0 %v1637
        %1791 = vmatpush.msra.mxu0 %v1703
        %1792 = vmatpush.msra.mxu0 %v1701
        %1793 = vmatpush.msra.mxu0 %v1687
        %1794 = vmatpush.msra.mxu0 %v1685
        %1795 = vmatpush.msra.mxu0 %v1671
        %1796 = vmatpush.msra.mxu0 %v1669
        %1797 = vmatpush.msra.mxu0 %v1655
        %1798 = vmatpush.msra.mxu0 %v1653
        %1799 = vmatmul.f32.gmra.mxu0 %v1778
        %v1800 = vpop.f32.mrf.mxu0
        %v1801 = vadd.f32 %v1774, %v1800
        %1802 = vdwg.mxu0
        %1803 = vmatpush.msra.mxu0 0.0
        %1804 = vmatpush.msra.mxu0 0.0
        %1805 = vmatpush.msra.mxu0 0.0
        %1806 = vmatpush.msra.mxu0 0.0
        %1807 = vmatpush.msra.mxu0 0.0
        %1808 = vmatpush.msra.mxu0 0.0
        %1809 = vmatpush.msra.mxu0 0.0
        %1810 = vmatpush.msra.mxu0 0.0
        %1811 = vmatpush.msra.mxu0 0.0
        %1812 = vmatpush.msra.mxu0 0.0
        %1813 = vmatpush.msra.mxu0 0.0
        %1814 = vmatpush.msra.mxu0 0.0
        %1815 = vmatpush.msra.mxu0 0.0
        %1816 = vmatpush.msra.mxu0 0.0
        %1817 = vmatpush.msra.mxu0 %v1767
        %1818 = vmatpush.msra.mxu0 %v1765
        %1819 = vmatmul.f32.gmra.mxu0 %v1781
        %v1820 = vpop.f32.mrf.mxu0
        %v1821 = vadd.f32 %v1801, %v1820
        %1822 = vdwg.mxu0
        %1823 = vmatpush.msra.mxu0 %v1752
        %1824 = vmatpush.msra.mxu0 %v1750
        %1825 = vmatpush.msra.mxu0 %v1736
        %1826 = vmatpush.msra.mxu0 %v1734
        %1827 = vmatpush.msra.mxu0 %v1720
        %1828 = vmatpush.msra.mxu0 %v1718
        %1829 = vmatpush.msra.mxu0 %v1640
        %1830 = vmatpush.msra.mxu0 %v1638
        %1831 = vmatpush.msra.mxu0 %v1704
        %1832 = vmatpush.msra.mxu0 %v1702
        %1833 = vmatpush.msra.mxu0 %v1688
        %1834 = vmatpush.msra.mxu0 %v1686
        %1835 = vmatpush.msra.mxu0 %v1672
        %1836 = vmatpush.msra.mxu0 %v1670
        %1837 = vmatpush.msra.mxu0 %v1656
        %1838 = vmatpush.msra.mxu0 %v1654
        %1839 = vmatmul.f32.gmra.mxu0 %v1778
        %v1840 = vpop.f32.mrf.mxu0
        %v1841 = vadd.f32 %v1774, %v1840
        %1842 = vdwg.mxu0
        %1843 = vmatpush.msra.mxu0 0.0
        %1844 = vmatpush.msra.mxu0 0.0
        %1845 = vmatpush.msra.mxu0 0.0
        %1846 = vmatpush.msra.mxu0 0.0
        %1847 = vmatpush.msra.mxu0 0.0
        %1848 = vmatpush.msra.mxu0 0.0
        %1849 = vmatpush.msra.mxu0 0.0
        %1850 = vmatpush.msra.mxu0 0.0
        %1851 = vmatpush.msra.mxu0 0.0
        %1852 = vmatpush.msra.mxu0 0.0
        %1853 = vmatpush.msra.mxu0 0.0
        %1854 = vmatpush.msra.mxu0 0.0
        %1855 = vmatpush.msra.mxu0 0.0
        %1856 = vmatpush.msra.mxu0 0.0
        %1857 = vmatpush.msra.mxu0 %v1768
        %1858 = vmatpush.msra.mxu0 %v1766
        %1859 = vmatmul.f32.gmra.mxu0 %v1781
        %v1860 = vpop.f32.mrf.mxu0
        %v1861 = vadd.f32 %v1841, %v1860
        %1862 = vdwg.mxu0
        %v1865 = vrot.slane %v1861, 4
        %v1866 = vsel %vm588, %v1821, %v1865
        %1868 = vst [vmem:[%s575] sm:$0xff] %v1866
        %p1869 = scmp.lt.s32.totalorder %s30, 1
        %s1870 = scalar_select %p1869, %s30, 1
        %s1871 = smul.addr %s1870, 2
        %s1872 = smul.addr %s1871, 4
        %s1873 = scalar_lea.vmem %s17, %s1872
        // Predicated region
        $region97: #{admm_resnet_forward.1} parent=87 // pred_check
          %p1874 = pneg %p410
        $region98: #{admm_resnet_forward.1} parent=87 // pred_check_branch
          %1876 = sbr.rel (%p1874) target = $region100
        $region99: #{admm_resnet_forward.1} parent=87 // pred_region
          _
        $region100: #{admm_resnet_forward.1} parent=87 // pred_fallthru
          _
      $region88: #{admm_resnet_forward.1} parent=5 // pred_fallthru
        _
      %p1877 = scmp.le.s32.totalorder 2, %s25
      // Predicated region
      $region101: #{admm_resnet_forward.1} parent=5 // pred_check
        %p1878 = pneg %p1877
      $region102: #{admm_resnet_forward.1} parent=5 // pred_check_branch
        %1880 = sbr.rel (%p1878) target = $region104
      $region103: #{admm_resnet_forward.1} parent=5 // pred_region
        %s1881 = ssub.s32 %s25, 2
        // Predicated region
        $region105: #{admm_resnet_forward.1} parent=103 // pred_check
          %p1882 = pneg %p416
        $region106: #{admm_resnet_forward.1} parent=103 // pred_check_branch
          %1884 = sbr.rel (%p1882) target = $region108
        $region107: #{admm_resnet_forward.1} parent=103 // pred_region
          %p1885 = scmp.lt.s32.totalorder %s31, 1
          %s1886 = scalar_select %p1885, %s31, 1
          %s1887 = smul.addr %s1886, 2
          %s1888 = smul.addr %s1887, 4
          %s1889 = scalar_lea.vmem %s17, %s1888
        $region108: #{admm_resnet_forward.1} parent=103 // pred_fallthru
          _
      $region104: #{admm_resnet_forward.1} parent=5 // pred_fallthru
        _
    $region6: #{admm_resnet_forward.1} parent=1 // loop_footer
      %s29 = sadd.s32 1, %s25
    $region7: #{admm_resnet_forward.1} parent=1 // loop_footer_branch
      %24 = sbr.rel target = $region3
    $region8: #{admm_resnet_forward.1} parent=1 // loop_exit
      _
    %1890 = vsyncpa [#allocation3], 1
    %s1891 = scalar_lea.sflag [#allocation3], 1
    %1892 = vsyncpa %s1891, 1
    %1893 = vsyncpa [#allocation5], 1

</llo_original>
